<compile_context>
chip_gen: v7x
topology: tpu7x:2x2x1
jax: 0.10.0
libtpu: 0.0.40
codegen_flags: <defaults>
</compile_context>

<pallas_src>
import functools

import jax
import jax.numpy as jnp
from jax.experimental import pallas as pl
from jax.experimental.pallas import tpu as pltpu

IN_FEATURES = 28 * 28          # 784
H1, H2, NCLASS = 256, 64, 10


def _round_up(x, m):
    return ((x + m - 1) // m) * m


def mlp_kernel(x_ref, w1_ref, b1_ref, w2_ref, b2_ref, w3_ref, b3_ref, o_ref):
    """Full forward for one batch tile: fc1+relu, fc2+relu, fc3, log_softmax."""
    # x tile arrives as f32 straight from HBM (no staging copy); cast to bf16
    # in VMEM for the MXU.
    x = x_ref[...].astype(jnp.bfloat16)                               # (bm, 784)

    # fc1 + ReLU  (bf16 operands, f32 accumulation / elementwise)
    h1 = jnp.dot(x, w1_ref[...], preferred_element_type=jnp.float32) + b1_ref[...]
    h1 = jnp.maximum(h1, 0.0).astype(jnp.bfloat16)                    # (bm, 256)

    # fc2 + ReLU
    h2 = jnp.dot(h1, w2_ref[...], preferred_element_type=jnp.float32) + b2_ref[...]
    h2 = jnp.maximum(h2, 0.0).astype(jnp.bfloat16)                    # (bm, 64)

    # fc3
    z = jnp.dot(h2, w3_ref[...], preferred_element_type=jnp.float32) + b3_ref[...]

    # log_softmax over classes (dim=1), numerically stable, all in f32
    m = jnp.max(z, axis=1, keepdims=True)
    s = z - m
    lse = jnp.log(jnp.sum(jnp.exp(s), axis=1, keepdims=True))
    o_ref[...] = s - lse                                              # (bm, 10) f32


@functools.partial(jax.jit, static_argnames=("bm",))
def net_forward(x, params, *, bm=2048):
    """x: (B, 784) float32. params: output of prepare_params (bf16 weights).

    Returns (B, 10) float32 log-probabilities (== F.log_softmax(fc3(...), 1)).
    """
    B, D = x.shape
    assert D == IN_FEATURES

    # Batch tiling: 128-aligned tiles, no batch padding / staging copy.
    # Cap the tile so (a) tiny batches aren't grossly over-covered and
    # (b) the parallel grid has >= 2 iterations when possible (v7x: 2 TCs/chip).
    bm = _round_up(max(int(bm), 128), 128)
    bm_eff = max(128, min(bm, _round_up(pl.cdiv(B, 2), 128)))
    grid = (pl.cdiv(B, bm_eff),)   # last tile over-covers; OOB rows are masked

    w1, b1 = params["w1"], params["b1"]
    w2, b2 = params["w2"], params["b2"]
    w3, b3 = params["w3"], params["b3"]

    # Resident operands (constant index_map -> DMA'd once, stay in VMEM).
    resident = lambda a: pl.BlockSpec(a.shape, lambda i: (0, 0))

    flops = 2 * B * (IN_FEATURES * H1 + H1 * H2 + H2 * NCLASS)
    bytes_accessed = (
        x.size * x.dtype.itemsize
        + sum(w.size * w.dtype.itemsize for w in (w1, w2, w3))
        + sum(b.size * b.dtype.itemsize for b in (b1, b2, b3))
        + B * NCLASS * 4)

    return pl.pallas_call(
        mlp_kernel,
        out_shape=jax.ShapeDtypeStruct((B, NCLASS), jnp.float32),
        grid_spec=pl.GridSpec(
            grid=grid,
            in_specs=[
                pl.BlockSpec((bm_eff, IN_FEATURES), lambda i: (i, 0)),  # x tile (f32)
                resident(w1), resident(b1),
                resident(w2), resident(b2),
                resident(w3), resident(b3),
            ],
            out_specs=pl.BlockSpec((bm_eff, NCLASS), lambda i: (i, 0)),
        ),
        compiler_params=pltpu.CompilerParams(
            dimension_semantics=("parallel",),
            # v5e's default scoped VMEM is 16 MiB; large f32 x tiles need more.
            vmem_limit_bytes=64 * 1024 * 1024),
        cost_estimate=pl.CostEstimate(
            flops=flops,
            transcendentals=B * (NCLASS + 1),
            bytes_accessed=bytes_accessed),
    )(x, w1, b1, w2, b2, w3, b3)


def init_params(key):
    """Deterministic init mimicking PyTorch nn.Linear default (U[-1/sqrt(fan_in), +]).

    Weights are stored pre-transposed as (in, out); biases as (1, out); all f32.
    """
    def linear(k, fan_in, fan_out):
        kw, kb = jax.random.split(k)
        bound = 1.0 / jnp.sqrt(fan_in)
        w = jax.random.uniform(kw, (fan_in, fan_out), jnp.float32, -bound, bound)
        b = jax.random.uniform(kb, (1, fan_out), jnp.float32, -bound, bound)
        return w, b

    k1, k2, k3 = jax.random.split(key, 3)
    w1, b1 = linear(k1, IN_FEATURES, H1)
    w2, b2 = linear(k2, H1, H2)
    w3, b3 = linear(k3, H2, NCLASS)
    return {"w1": w1, "b1": b1, "w2": w2, "b2": b2, "w3": w3, "b3": b3}


def prepare_params(params):
    """One-time kernel-side prep (hoisted out of the forward): bf16 (in,out)
    weights, f32 (1,out) biases."""
    dims = {"1": (IN_FEATURES, H1), "2": (H1, H2), "3": (H2, NCLASS)}
    out = {}
    for i, (fin, fout) in dims.items():
        out[f"w{i}"] = jnp.asarray(params[f"w{i}"], jnp.bfloat16).reshape(fin, fout)
        out[f"b{i}"] = jnp.asarray(params[f"b{i}"], jnp.float32).reshape(1, fout)
    return out


def reference_forward(x, p):
    """Pure-JAX reference matching the kernel's precision (bf16 operands, f32 accum)."""
    bf = jnp.bfloat16
    h1 = jnp.maximum(
        jnp.dot(x.astype(bf), p["w1"].astype(bf),
                preferred_element_type=jnp.float32) + p["b1"], 0.0)
    h2 = jnp.maximum(
        jnp.dot(h1.astype(bf), p["w2"].astype(bf),
                preferred_element_type=jnp.float32) + p["b2"], 0.0)
    z = jnp.dot(h2.astype(bf), p["w3"].astype(bf),
                preferred_element_type=jnp.float32) + p["b3"]
    return jax.nn.log_softmax(z, axis=1)


def reference_forward_f32(x, p):
    h1 = jnp.maximum(x @ p["w1"] + p["b1"], 0.0)
    h2 = jnp.maximum(h1 @ p["w2"] + p["b2"], 0.0)
    return jax.nn.log_softmax(h2 @ p["w3"] + p["b3"], axis=1)


if __name__ == "__main__":
    key = jax.random.PRNGKey(0)
    kx, kx2, kp = jax.random.split(key, 3)

    params = init_params(kp)            # f32, PyTorch-style
    kparams = prepare_params(params)    # bf16 weights, done once (not per call)

    # Case 1: small batch (single over-covered tile, masked rows exercised).
    B = 16
    x = jax.random.normal(kx, (B, IN_FEATURES), jnp.float32)
    out = jax.block_until_ready(net_forward(x, kparams))
    assert out.shape == (B, NCLASS)

    ref = reference_forward(x, params)          # same precision as kernel
    assert jnp.allclose(out, ref, atol=2e-3, rtol=2e-3), float(
        jnp.max(jnp.abs(out - ref)))
    ref32 = reference_forward_f32(x, params)    # full f32 math (looser tol)
    assert jnp.allclose(out, ref32, atol=5e-2, rtol=5e-2), float(
        jnp.max(jnp.abs(out - ref32)))

    # Case 2: non-tile-aligned batch spanning 2 grid iterations.
    B2 = 300
    x2 = jax.random.normal(kx2, (B2, IN_FEATURES), jnp.float32)
    out2 = jax.block_until_ready(net_forward(x2, kparams))
    assert out2.shape == (B2, NCLASS)
    ref2 = reference_forward(x2, params)
    assert jnp.allclose(out2, ref2, atol=2e-3, rtol=2e-3), float(
        jnp.max(jnp.abs(out2 - ref2)))

    print("KERNEL_OK")
</pallas_src>

<mosaic_0001>
module attributes {stable_mosaic.version = 11 : i64} {
  func.func @mlp_kernel(%arg0: i32, %arg1: memref<128x784xf32, #tpu.memory_space<vmem>>, %arg2: memref<784x256xbf16, #tpu.memory_space<vmem>>, %arg3: memref<1x256xf32, #tpu.memory_space<vmem>>, %arg4: memref<256x64xbf16, #tpu.memory_space<vmem>>, %arg5: memref<1x64xf32, #tpu.memory_space<vmem>>, %arg6: memref<64x10xbf16, #tpu.memory_space<vmem>>, %arg7: memref<1x10xf32, #tpu.memory_space<vmem>>, %arg8: memref<128x10xf32, #tpu.memory_space<vmem>>) attributes {dimension_semantics = [#tpu.dimension_semantics<parallel>], iteration_bounds = array<i64: 1>, scalar_prefetch = 0 : i64, scratch_operands = 0 : i64, tpu.core_type = #tpu.core_type<tc>, window_params = [{transform_indices = @transform_0, window_bounds = array<i64: 128, 784>}, {pipeline_mode = #tpu.pipeline_mode<synchronous>, transform_indices = @transform_1, window_bounds = array<i64: 784, 256>}, {pipeline_mode = #tpu.pipeline_mode<synchronous>, transform_indices = @transform_2, window_bounds = array<i64: 1, 256>}, {pipeline_mode = #tpu.pipeline_mode<synchronous>, transform_indices = @transform_3, window_bounds = array<i64: 256, 64>}, {pipeline_mode = #tpu.pipeline_mode<synchronous>, transform_indices = @transform_4, window_bounds = array<i64: 1, 64>}, {pipeline_mode = #tpu.pipeline_mode<synchronous>, transform_indices = @transform_5, window_bounds = array<i64: 64, 10>}, {pipeline_mode = #tpu.pipeline_mode<synchronous>, transform_indices = @transform_6, window_bounds = array<i64: 1, 10>}, {transform_indices = @transform_7, window_bounds = array<i64: 128, 10>}]} {
    %c0 = arith.constant 0 : index
    %c0_0 = arith.constant 0 : index
    %0 = vector.load %arg1[%c0, %c0_0] : memref<128x784xf32, #tpu.memory_space<vmem>>, vector<128x784xf32>
    %1 = arith.truncf %0 : vector<128x784xf32> to vector<128x784xbf16>
    %c0_1 = arith.constant 0 : index
    %c0_2 = arith.constant 0 : index
    %2 = vector.load %arg2[%c0_1, %c0_2] : memref<784x256xbf16, #tpu.memory_space<vmem>>, vector<784x256xbf16>
    %cst = arith.constant dense<0.000000e+00> : vector<128x256xf32>
    %3 = tpu.matmul %1, %2, %cst {dimension_numbers = #tpu.dot_dimension_numbers<[1], [0], [0], [1], [0, 0, 1, 1], [], []>} : vector<128x784xbf16>, vector<784x256xbf16>, vector<128x256xf32> -> vector<128x256xf32>
    %c0_3 = arith.constant 0 : index
    %c0_4 = arith.constant 0 : index
    %4 = vector.load %arg3[%c0_3, %c0_4] : memref<1x256xf32, #tpu.memory_space<vmem>>, vector<1x256xf32>
    %5 = vector.broadcast %4 : vector<1x256xf32> to vector<128x256xf32>
    %6 = arith.addf %3, %5 : vector<128x256xf32>
    %cst_5 = arith.constant 0.000000e+00 : f32
    %7 = vector.broadcast %cst_5 : f32 to vector<128x256xf32>
    %8 = arith.maximumf %6, %7 : vector<128x256xf32>
    %9 = arith.truncf %8 : vector<128x256xf32> to vector<128x256xbf16>
    %c0_6 = arith.constant 0 : index
    %c0_7 = arith.constant 0 : index
    %10 = vector.load %arg4[%c0_6, %c0_7] : memref<256x64xbf16, #tpu.memory_space<vmem>>, vector<256x64xbf16>
    %cst_8 = arith.constant dense<0.000000e+00> : vector<128x64xf32>
    %11 = tpu.matmul %9, %10, %cst_8 {dimension_numbers = #tpu.dot_dimension_numbers<[1], [0], [0], [1], [0, 0, 1, 1], [], []>} : vector<128x256xbf16>, vector<256x64xbf16>, vector<128x64xf32> -> vector<128x64xf32>
    %c0_9 = arith.constant 0 : index
    %c0_10 = arith.constant 0 : index
    %12 = vector.load %arg5[%c0_9, %c0_10] : memref<1x64xf32, #tpu.memory_space<vmem>>, vector<1x64xf32>
    %13 = vector.broadcast %12 : vector<1x64xf32> to vector<128x64xf32>
    %14 = arith.addf %11, %13 : vector<128x64xf32>
    %cst_11 = arith.constant 0.000000e+00 : f32
    %15 = vector.broadcast %cst_11 : f32 to vector<128x64xf32>
    %16 = arith.maximumf %14, %15 : vector<128x64xf32>
    %17 = arith.truncf %16 : vector<128x64xf32> to vector<128x64xbf16>
    %c0_12 = arith.constant 0 : index
    %c0_13 = arith.constant 0 : index
    %18 = vector.load %arg6[%c0_12, %c0_13] : memref<64x10xbf16, #tpu.memory_space<vmem>>, vector<64x10xbf16>
    %cst_14 = arith.constant dense<0.000000e+00> : vector<128x10xf32>
    %19 = tpu.matmul %17, %18, %cst_14 {dimension_numbers = #tpu.dot_dimension_numbers<[1], [0], [0], [1], [0, 0, 1, 1], [], []>} : vector<128x64xbf16>, vector<64x10xbf16>, vector<128x10xf32> -> vector<128x10xf32>
    %c0_15 = arith.constant 0 : index
    %c0_16 = arith.constant 0 : index
    %20 = vector.load %arg7[%c0_15, %c0_16] : memref<1x10xf32, #tpu.memory_space<vmem>>, vector<1x10xf32>
    %21 = vector.broadcast %20 : vector<1x10xf32> to vector<128x10xf32>
    %22 = arith.addf %19, %21 : vector<128x10xf32>
    %cst_17 = arith.constant dense<0xFF800000> : vector<128xf32>
    %23 = vector.multi_reduction <maximumf>, %22, %cst_17 [1] : vector<128x10xf32> to vector<128xf32>
    %24 = vector.shape_cast %23 : vector<128xf32> to vector<128x1xf32>
    %25 = vector.broadcast %24 : vector<128x1xf32> to vector<128x10xf32>
    %26 = arith.subf %22, %25 : vector<128x10xf32>
    %27 = math.exp %26 : vector<128x10xf32>
    %cst_18 = arith.constant dense<0.000000e+00> : vector<128xf32>
    %28 = vector.multi_reduction <add>, %27, %cst_18 [1] : vector<128x10xf32> to vector<128xf32>
    %29 = vector.shape_cast %28 : vector<128xf32> to vector<128x1xf32>
    %30 = math.log %29 : vector<128x1xf32>
    %31 = vector.broadcast %30 : vector<128x1xf32> to vector<128x10xf32>
    %32 = arith.subf %26, %31 : vector<128x10xf32>
    %c0_19 = arith.constant 0 : index
    %c0_20 = arith.constant 0 : index
    %33 = vector.load %arg8[%c0_19, %c0_20] : memref<128x10xf32, #tpu.memory_space<vmem>>, vector<128x10xf32>
    tpu.vector_store %arg8[%c0_19, %c0_20], %32 {strides = array<i32>} : memref<128x10xf32, #tpu.memory_space<vmem>>, vector<128x10xf32>,
    return
  }
  func.func @transform_0(%arg0: i32) -> (i32, i32) {
    %c0_i32 = arith.constant 0 : i32
    %c0_i32_0 = arith.constant 0 : i32
    return %arg0, %c0_i32 : i32, i32
  }
  func.func @transform_1(%arg0: i32) -> (i32, i32) {
    %c0_i32 = arith.constant 0 : i32
    %c0_i32_0 = arith.constant 0 : i32
    %c0_i32_1 = arith.constant 0 : i32
    return %c0_i32, %c0_i32_0 : i32, i32
  }
  func.func @transform_2(%arg0: i32) -> (i32, i32) {
    %c0_i32 = arith.constant 0 : i32
    %c0_i32_0 = arith.constant 0 : i32
    %c0_i32_1 = arith.constant 0 : i32
    return %c0_i32, %c0_i32_0 : i32, i32
  }
  func.func @transform_3(%arg0: i32) -> (i32, i32) {
    %c0_i32 = arith.constant 0 : i32
    %c0_i32_0 = arith.constant 0 : i32
    %c0_i32_1 = arith.constant 0 : i32
    return %c0_i32, %c0_i32_0 : i32, i32
  }
  func.func @transform_4(%arg0: i32) -> (i32, i32) {
    %c0_i32 = arith.constant 0 : i32
    %c0_i32_0 = arith.constant 0 : i32
    %c0_i32_1 = arith.constant 0 : i32
    return %c0_i32, %c0_i32_0 : i32, i32
  }
  func.func @transform_5(%arg0: i32) -> (i32, i32) {
    %c0_i32 = arith.constant 0 : i32
    %c0_i32_0 = arith.constant 0 : i32
    %c0_i32_1 = arith.constant 0 : i32
    return %c0_i32, %c0_i32_0 : i32, i32
  }
  func.func @transform_6(%arg0: i32) -> (i32, i32) {
    %c0_i32 = arith.constant 0 : i32
    %c0_i32_0 = arith.constant 0 : i32
    %c0_i32_1 = arith.constant 0 : i32
    return %c0_i32, %c0_i32_0 : i32, i32
  }
  func.func @transform_7(%arg0: i32) -> (i32, i32) {
    %c0_i32 = arith.constant 0 : i32
    %c0_i32_0 = arith.constant 0 : i32
    return %arg0, %c0_i32 : i32, i32
  }
}

</mosaic_0001>

<llo_original>
// kernel: net_forward.1
$region0: #{net_forward.1}
  #allocation0 [shape = 'u32[]', space=smem, size = 0x4, offset = 0x4, fixed_abs, tag = 'smem constant byte address 0x4 - core index']
  #allocation1 [shape = 'u32[144,128]{1,0:T(1,128)}', space=vmem, size = 0x12000, scoped, tag = 'internal scratch']
  %s0 = inlined_call_operand.hbm [shape: f32[16,784], index: 0, kind: input, shape index: {}]
  %s1 = inlined_call_operand.hbm [shape: bf16[784,256], index: 1, kind: input, shape index: {}]
  %s2 = inlined_call_operand.hbm [shape: f32[1,256], index: 2, kind: input, shape index: {}]
  %s3 = inlined_call_operand.hbm [shape: bf16[256,64], index: 3, kind: input, shape index: {}]
  %s4 = inlined_call_operand.hbm [shape: f32[1,64], index: 4, kind: input, shape index: {}]
  %s5 = inlined_call_operand.hbm [shape: bf16[64,10], index: 5, kind: input, shape index: {}]
  %s6 = inlined_call_operand.hbm [shape: f32[1,10], index: 6, kind: input, shape index: {}]
  %s7 = inlined_call_operand.hbm [shape: f32[16,10], index: 7, kind: output, shape index: {}]
  %s8 = sld [smem:[#allocation0]]
  $region66: #{net_forward.1} parent=0
    _
  %s10 = ssub.s32 1, %s8
  %s11 = scalar_select 0, %s10, %s8
  $region1: #{net_forward.1} parent=0
    #allocation2 [shape = 'u8[458752]{0}', space=vmem, size = 0x70000, scoped, tag = 'input window, operand 0, single buffered']
    #allocation3 [shape = 's32[1]{0}', space=sflag, size = 0x4, scoped, tag = 'scoped memory for net_forward.1']
    #allocation4 [shape = 's32[1]{0}', space=sflag, size = 0x4, scoped, tag = 'scoped memory for net_forward.1']
    #allocation5 [shape = 'u8[401408]{0}', space=vmem, size = 0x62000, scoped, tag = 'input window, operand 1, single buffered']
    #allocation6 [shape = 's32[1]{0}', space=sflag, size = 0x4, scoped, tag = 'scoped memory for net_forward.1']
    #allocation7 [shape = 'u8[1024]{0}', space=vmem, size = 0x400, scoped, tag = 'input window, operand 2, single buffered']
    #allocation8 [shape = 'u8[65536]{0}', space=vmem, size = 0x10000, scoped, tag = 'input window, operand 3, single buffered']
    #allocation9 [shape = 's32[1]{0}', space=sflag, size = 0x4, scoped, tag = 'scoped memory for net_forward.1']
    #allocation10 [shape = 'u8[512]{0}', space=vmem, size = 0x400, scoped, tag = 'input window, operand 4, single buffered']
    #allocation11 [shape = 'u8[16384]{0}', space=vmem, size = 0x4000, scoped, tag = 'input window, operand 5, single buffered']
    #allocation12 [shape = 's32[1]{0}', space=sflag, size = 0x4, scoped, tag = 'scoped memory for net_forward.1']
    #allocation13 [shape = 'u8[512]{0}', space=vmem, size = 0x400, scoped, tag = 'input window, operand 6, single buffered']
    #allocation14 [shape = 'u8[65536]{0}', space=vmem, size = 0x10000, scoped, tag = 'output window, operand 0, single buffered']
    %12 = vsyncpa [#allocation3], 0
    %13 = vsyncpa [#allocation6], 0
    %14 = vsyncpa [#allocation9], 0
    %15 = vsyncpa [#allocation12], 0
    %16 = vsyncpa [#allocation4], 0
    // Predicated region
    $region2: #{net_forward.1} parent=1 // pred_check
      _
    $region3: #{net_forward.1} parent=1 // pred_check_branch
      %18 = sbr.rel (0) target = $region5
    $region4: #{net_forward.1} parent=1 // pred_region
      %s20 = ssub.s32 14336, 1792
      %21 = vsyncadd [#allocation3], %s20
      %s22 = sshll.u32 [#allocation2], 4
      %s23 = int_to_ptr.vmem [resolvable:$true] %s22
      %28 = dma.hbm_to_vmem [thread:$0]  %s0, 1792, %s23, [#allocation3], 896, 896, 56
    $region5: #{net_forward.1} parent=1 // pred_fallthru
      _
    // Predicated region
    $region6: #{net_forward.1} parent=1 // pred_check
      _
    $region7: #{net_forward.1} parent=1 // pred_check_branch
      %30 = sbr.rel (0) target = $region9
    $region8: #{net_forward.1} parent=1 // pred_region
      %s32 = ssub.s32 12544, 12544
      %33 = vsyncadd [#allocation6], %s32
      %s34 = sshll.u32 [#allocation5], 4
      %s35 = int_to_ptr.vmem [resolvable:$true] %s34
      %40 = dma.hbm_to_vmem [thread:$0]  %s1, 12544, %s35, [#allocation6], 128, 128, 8
    $region9: #{net_forward.1} parent=1 // pred_fallthru
      _
    // Predicated region
    $region10: #{net_forward.1} parent=1 // pred_check
      _
    $region11: #{net_forward.1} parent=1 // pred_check_branch
      %42 = sbr.rel (0) target = $region13
    $region12: #{net_forward.1} parent=1 // pred_region
      %s44 = ssub.s32 32, 32
      %45 = vsyncadd [#allocation6], %s44
      %s47 = sshll.u32 [#allocation7], 4
      %s48 = int_to_ptr.vmem [resolvable:$true] %s47
      %50 = dma.hbm_to_vmem [thread:$0]  %s2, 32, %s48, [#allocation6]
    $region13: #{net_forward.1} parent=1 // pred_fallthru
      _
    // Predicated region
    $region14: #{net_forward.1} parent=1 // pred_check
      _
    $region15: #{net_forward.1} parent=1 // pred_check_branch
      %52 = sbr.rel (0) target = $region17
    $region16: #{net_forward.1} parent=1 // pred_region
      %s54 = ssub.s32 2048, 2048
      %55 = vsyncadd [#allocation9], %s54
      %s56 = sshll.u32 [#allocation8], 4
      %s57 = int_to_ptr.vmem [resolvable:$true] %s56
      %62 = dma.hbm_to_vmem [thread:$0]  %s3, 2048, %s57, [#allocation9], 64, 64, 4
    $region17: #{net_forward.1} parent=1 // pred_fallthru
      _
    // Predicated region
    $region18: #{net_forward.1} parent=1 // pred_check
      _
    $region19: #{net_forward.1} parent=1 // pred_check_branch
      %64 = sbr.rel (0) target = $region21
    $region20: #{net_forward.1} parent=1 // pred_region
      %s66 = ssub.s32 16, 16
      %67 = vsyncadd [#allocation9], %s66
      %s69 = sshll.u32 [#allocation10], 4
      %s70 = int_to_ptr.vmem [resolvable:$true] %s69
      %72 = dma.hbm_to_vmem [thread:$0]  %s4, 16, %s70, [#allocation9]
    $region21: #{net_forward.1} parent=1 // pred_fallthru
      _
    // Predicated region
    $region22: #{net_forward.1} parent=1 // pred_check
      _
    $region23: #{net_forward.1} parent=1 // pred_check_branch
      %74 = sbr.rel (0) target = $region25
    $region24: #{net_forward.1} parent=1 // pred_region
      %s76 = ssub.s32 512, 512
      %77 = vsyncadd [#allocation12], %s76
      %s78 = sshll.u32 [#allocation11], 4
      %s79 = int_to_ptr.vmem [resolvable:$true] %s78
      %84 = dma.hbm_to_vmem [thread:$0]  %s5, 512, %s79, [#allocation12], 64, 64, 4
    $region25: #{net_forward.1} parent=1 // pred_fallthru
      _
    // Predicated region
    $region26: #{net_forward.1} parent=1 // pred_check
      _
    $region27: #{net_forward.1} parent=1 // pred_check_branch
      %86 = sbr.rel (0) target = $region29
    $region28: #{net_forward.1} parent=1 // pred_region
      %s88 = ssub.s32 16, 16
      %89 = vsyncadd [#allocation12], %s88
      %s91 = sshll.u32 [#allocation13], 4
      %s92 = int_to_ptr.vmem [resolvable:$true] %s91
      %94 = dma.hbm_to_vmem [thread:$0]  %s6, 16, %s92, [#allocation12]
    $region29: #{net_forward.1} parent=1 // pred_fallthru
      _
    // Predicated region
    $region30: #{net_forward.1} parent=1 // pred_check
      _
    $region31: #{net_forward.1} parent=1 // pred_check_branch
      %96 = sbr.rel (0) target = $region33
    $region32: #{net_forward.1} parent=1 // pred_region
      %97 = dma.done [#allocation3], 14336
    $region33: #{net_forward.1} parent=1 // pred_fallthru
      _
    // Predicated region
    $region34: #{net_forward.1} parent=1 // pred_check
      _
    $region35: #{net_forward.1} parent=1 // pred_check_branch
      %99 = sbr.rel (0) target = $region37
    $region36: #{net_forward.1} parent=1 // pred_region
      %100 = dma.done [#allocation6], 12544
    $region37: #{net_forward.1} parent=1 // pred_fallthru
      _
    // Predicated region
    $region38: #{net_forward.1} parent=1 // pred_check
      _
    $region39: #{net_forward.1} parent=1 // pred_check_branch
      %102 = sbr.rel (0) target = $region41
    $region40: #{net_forward.1} parent=1 // pred_region
      %103 = dma.done [#allocation6], 32
    $region41: #{net_forward.1} parent=1 // pred_fallthru
      _
    // Predicated region
    $region42: #{net_forward.1} parent=1 // pred_check
      _
    $region43: #{net_forward.1} parent=1 // pred_check_branch
      %105 = sbr.rel (0) target = $region45
    $region44: #{net_forward.1} parent=1 // pred_region
      %106 = dma.done [#allocation9], 2048
    $region45: #{net_forward.1} parent=1 // pred_fallthru
      _
    // Predicated region
    $region46: #{net_forward.1} parent=1 // pred_check
      _
    $region47: #{net_forward.1} parent=1 // pred_check_branch
      %108 = sbr.rel (0) target = $region49
    $region48: #{net_forward.1} parent=1 // pred_region
      %109 = dma.done [#allocation9], 16
    $region49: #{net_forward.1} parent=1 // pred_fallthru
      _
    // Predicated region
    $region50: #{net_forward.1} parent=1 // pred_check
      _
    $region51: #{net_forward.1} parent=1 // pred_check_branch
      %111 = sbr.rel (0) target = $region53
    $region52: #{net_forward.1} parent=1 // pred_region
      %112 = dma.done [#allocation12], 512
    $region53: #{net_forward.1} parent=1 // pred_fallthru
      _
    // Predicated region
    $region54: #{net_forward.1} parent=1 // pred_check
      _
    $region55: #{net_forward.1} parent=1 // pred_check_branch
      %114 = sbr.rel (0) target = $region57
    $region56: #{net_forward.1} parent=1 // pred_region
      %115 = dma.done [#allocation12], 16
    $region57: #{net_forward.1} parent=1 // pred_fallthru
      _
    %v117 = vld [vmem:[#allocation2] sm:$0xff]
    %v118 = vld [vmem:[#allocation2 + $0x8] sm:$0xff]
    %v119 = vld [vmem:[#allocation2 + $0x10] sm:$0xff]
    %v120 = vld [vmem:[#allocation2 + $0x18] sm:$0xff]
    %v121 = vld [vmem:[#allocation2 + $0x20] sm:$0xff]
    %v122 = vld [vmem:[#allocation2 + $0x28] sm:$0xff]
    %v123 = vld [vmem:[#allocation2 + $0x30] sm:$0xff]
    %v124 = vld [vmem:[#allocation2 + $0x38] sm:$0xff]
    %v125 = vld [vmem:[#allocation2 + $0x40] sm:$0xff]
    %v126 = vld [vmem:[#allocation2 + $0x48] sm:$0xff]
    %v127 = vld [vmem:[#allocation2 + $0x50] sm:$0xff]
    %v128 = vld [vmem:[#allocation2 + $0x58] sm:$0xff]
    %v129 = vld [vmem:[#allocation2 + $0x60] sm:$0xff]
    %v130 = vld [vmem:[#allocation2 + $0x68] sm:$0xff]
    %v131 = vld [vmem:[#allocation2 + $0x70] sm:$0xff]
    %v132 = vld [vmem:[#allocation2 + $0x78] sm:$0xff]
    %v133 = vld [vmem:[#allocation2 + $0x80] sm:$0xff]
    %v134 = vld [vmem:[#allocation2 + $0x88] sm:$0xff]
    %v135 = vld [vmem:[#allocation2 + $0x90] sm:$0xff]
    %v136 = vld [vmem:[#allocation2 + $0x98] sm:$0xff]
    %v137 = vld [vmem:[#allocation2 + $0xa0] sm:$0xff]
    %v138 = vld [vmem:[#allocation2 + $0xa8] sm:$0xff]
    %v139 = vld [vmem:[#allocation2 + $0xb0] sm:$0xff]
    %v140 = vld [vmem:[#allocation2 + $0xb8] sm:$0xff]
    %v141 = vld [vmem:[#allocation2 + $0xc0] sm:$0xff]
    %v142 = vld [vmem:[#allocation2 + $0xc8] sm:$0xff]
    %v143 = vld [vmem:[#allocation2 + $0xd0] sm:$0xff]
    %v144 = vld [vmem:[#allocation2 + $0xd8] sm:$0xff]
    %v145 = vld [vmem:[#allocation2 + $0xe0] sm:$0xff]
    %v146 = vld [vmem:[#allocation2 + $0xe8] sm:$0xff]
    %v147 = vld [vmem:[#allocation2 + $0xf0] sm:$0xff]
    %v148 = vld [vmem:[#allocation2 + $0xf8] sm:$0xff]
    %v149 = vld [vmem:[#allocation2 + $0x100] sm:$0xff]
    %v150 = vld [vmem:[#allocation2 + $0x108] sm:$0xff]
    %v151 = vld [vmem:[#allocation2 + $0x110] sm:$0xff]
    %v152 = vld [vmem:[#allocation2 + $0x118] sm:$0xff]
    %v153 = vld [vmem:[#allocation2 + $0x120] sm:$0xff]
    %v154 = vld [vmem:[#allocation2 + $0x128] sm:$0xff]
    %v155 = vld [vmem:[#allocation2 + $0x130] sm:$0xff]
    %v156 = vld [vmem:[#allocation2 + $0x138] sm:$0xff]
    %v157 = vld [vmem:[#allocation2 + $0x140] sm:$0xff]
    %v158 = vld [vmem:[#allocation2 + $0x148] sm:$0xff]
    %v159 = vld [vmem:[#allocation2 + $0x150] sm:$0xff]
    %v160 = vld [vmem:[#allocation2 + $0x158] sm:$0xff]
    %v161 = vld [vmem:[#allocation2 + $0x160] sm:$0xff]
    %v162 = vld [vmem:[#allocation2 + $0x168] sm:$0xff]
    %v163 = vld [vmem:[#allocation2 + $0x170] sm:$0xff]
    %v164 = vld [vmem:[#allocation2 + $0x178] sm:$0xff]
    %v165 = vld [vmem:[#allocation2 + $0x180] sm:$0xff]
    %v166 = vld [vmem:[#allocation2 + $0x188] sm:$0xff]
    %v167 = vld [vmem:[#allocation2 + $0x190] sm:$0xff]
    %v168 = vld [vmem:[#allocation2 + $0x198] sm:$0xff]
    %v169 = vld [vmem:[#allocation2 + $0x1a0] sm:$0xff]
    %v170 = vld [vmem:[#allocation2 + $0x1a8] sm:$0xff]
    %v171 = vld [vmem:[#allocation2 + $0x1b0] sm:$0xff]
    %v172 = vld [vmem:[#allocation2 + $0x1b8] sm:$0xff]
    %v173 = vld [vmem:[#allocation2 + $0x1c0] sm:$0xff]
    %v174 = vld [vmem:[#allocation2 + $0x1c8] sm:$0xff]
    %v175 = vld [vmem:[#allocation2 + $0x1d0] sm:$0xff]
    %v176 = vld [vmem:[#allocation2 + $0x1d8] sm:$0xff]
    %v177 = vld [vmem:[#allocation2 + $0x1e0] sm:$0xff]
    %v178 = vld [vmem:[#allocation2 + $0x1e8] sm:$0xff]
    %v179 = vld [vmem:[#allocation2 + $0x1f0] sm:$0xff]
    %v180 = vld [vmem:[#allocation2 + $0x1f8] sm:$0xff]
    %v181 = vld [vmem:[#allocation2 + $0x200] sm:$0xff]
    %v182 = vld [vmem:[#allocation2 + $0x208] sm:$0xff]
    %v183 = vld [vmem:[#allocation2 + $0x210] sm:$0xff]
    %v184 = vld [vmem:[#allocation2 + $0x218] sm:$0xff]
    %v185 = vld [vmem:[#allocation2 + $0x220] sm:$0xff]
    %v186 = vld [vmem:[#allocation2 + $0x228] sm:$0xff]
    %v187 = vld [vmem:[#allocation2 + $0x230] sm:$0xff]
    %v188 = vld [vmem:[#allocation2 + $0x238] sm:$0xff]
    %v189 = vld [vmem:[#allocation2 + $0x240] sm:$0xff]
    %v190 = vld [vmem:[#allocation2 + $0x248] sm:$0xff]
    %v191 = vld [vmem:[#allocation2 + $0x250] sm:$0xff]
    %v192 = vld [vmem:[#allocation2 + $0x258] sm:$0xff]
    %v193 = vld [vmem:[#allocation2 + $0x260] sm:$0xff]
    %v194 = vld [vmem:[#allocation2 + $0x268] sm:$0xff]
    %v195 = vld [vmem:[#allocation2 + $0x270] sm:$0xff]
    %v196 = vld [vmem:[#allocation2 + $0x278] sm:$0xff]
    %v197 = vld [vmem:[#allocation2 + $0x280] sm:$0xff]
    %v198 = vld [vmem:[#allocation2 + $0x288] sm:$0xff]
    %v199 = vld [vmem:[#allocation2 + $0x290] sm:$0xff]
    %v200 = vld [vmem:[#allocation2 + $0x298] sm:$0xff]
    %v201 = vld [vmem:[#allocation2 + $0x2a0] sm:$0xff]
    %v202 = vld [vmem:[#allocation2 + $0x2a8] sm:$0xff]
    %v203 = vld [vmem:[#allocation2 + $0x2b0] sm:$0xff]
    %v204 = vld [vmem:[#allocation2 + $0x2b8] sm:$0xff]
    %v205 = vld [vmem:[#allocation2 + $0x2c0] sm:$0xff]
    %v206 = vld [vmem:[#allocation2 + $0x2c8] sm:$0xff]
    %v207 = vld [vmem:[#allocation2 + $0x2d0] sm:$0xff]
    %v208 = vld [vmem:[#allocation2 + $0x2d8] sm:$0xff]
    %v209 = vld [vmem:[#allocation2 + $0x2e0] sm:$0xff]
    %v210 = vld [vmem:[#allocation2 + $0x2e8] sm:$0xff]
    %v211 = vld [vmem:[#allocation2 + $0x2f0] sm:$0xff]
    %v212 = vld [vmem:[#allocation2 + $0x2f8] sm:$0xff]
    %v213 = vld [vmem:[#allocation2 + $0x300] sm:$0xff]
    %v214 = vld [vmem:[#allocation2 + $0x308] sm:$0xff]
    %v215 = vld [vmem:[#allocation2 + $0x310] sm:$0xff]
    %v216 = vld [vmem:[#allocation2 + $0x318] sm:$0xff]
    %v217 = vld [vmem:[#allocation2 + $0x320] sm:$0xff]
    %v218 = vld [vmem:[#allocation2 + $0x328] sm:$0xff]
    %v219 = vld [vmem:[#allocation2 + $0x330] sm:$0xff]
    %v220 = vld [vmem:[#allocation2 + $0x338] sm:$0xff]
    %v221 = vld [vmem:[#allocation2 + $0x340] sm:$0xff]
    %v222 = vld [vmem:[#allocation2 + $0x348] sm:$0xff]
    %v223 = vld [vmem:[#allocation2 + $0x350] sm:$0xff]
    %v224 = vld [vmem:[#allocation2 + $0x358] sm:$0xff]
    %v225 = vld [vmem:[#allocation2 + $0x360] sm:$0xff]
    %v226 = vld [vmem:[#allocation2 + $0x368] sm:$0xff]
    %v227 = vld [vmem:[#allocation2 + $0x370] sm:$0xff]
    %v228 = vld [vmem:[#allocation2 + $0x378] sm:$0xff]
    %v229 = vpack.c.bf16 %v124, %v117
    %v230 = vpack.c.bf16 %v125, %v118
    %v231 = vpack.c.bf16 %v126, %v119
    %v232 = vpack.c.bf16 %v127, %v120
    %v233 = vpack.c.bf16 %v128, %v121
    %v234 = vpack.c.bf16 %v129, %v122
    %v235 = vpack.c.bf16 %v130, %v123
    %v236 = vpack.c.bf16 %v138, %v131
    %v237 = vpack.c.bf16 %v139, %v132
    %v238 = vpack.c.bf16 %v140, %v133
    %v239 = vpack.c.bf16 %v141, %v134
    %v240 = vpack.c.bf16 %v142, %v135
    %v241 = vpack.c.bf16 %v143, %v136
    %v242 = vpack.c.bf16 %v144, %v137
    %v243 = vpack.c.bf16 %v152, %v145
    %v244 = vpack.c.bf16 %v153, %v146
    %v245 = vpack.c.bf16 %v154, %v147
    %v246 = vpack.c.bf16 %v155, %v148
    %v247 = vpack.c.bf16 %v156, %v149
    %v248 = vpack.c.bf16 %v157, %v150
    %v249 = vpack.c.bf16 %v158, %v151
    %v250 = vpack.c.bf16 %v166, %v159
    %v251 = vpack.c.bf16 %v167, %v160
    %v252 = vpack.c.bf16 %v168, %v161
    %v253 = vpack.c.bf16 %v169, %v162
    %v254 = vpack.c.bf16 %v170, %v163
    %v255 = vpack.c.bf16 %v171, %v164
    %v256 = vpack.c.bf16 %v172, %v165
    %v257 = vpack.c.bf16 %v180, %v173
    %v258 = vpack.c.bf16 %v181, %v174
    %v259 = vpack.c.bf16 %v182, %v175
    %v260 = vpack.c.bf16 %v183, %v176
    %v261 = vpack.c.bf16 %v184, %v177
    %v262 = vpack.c.bf16 %v185, %v178
    %v263 = vpack.c.bf16 %v186, %v179
    %v264 = vpack.c.bf16 %v194, %v187
    %v265 = vpack.c.bf16 %v195, %v188
    %v266 = vpack.c.bf16 %v196, %v189
    %v267 = vpack.c.bf16 %v197, %v190
    %v268 = vpack.c.bf16 %v198, %v191
    %v269 = vpack.c.bf16 %v199, %v192
    %v270 = vpack.c.bf16 %v200, %v193
    %v271 = vpack.c.bf16 %v208, %v201
    %v272 = vpack.c.bf16 %v209, %v202
    %v273 = vpack.c.bf16 %v210, %v203
    %v274 = vpack.c.bf16 %v211, %v204
    %v275 = vpack.c.bf16 %v212, %v205
    %v276 = vpack.c.bf16 %v213, %v206
    %v277 = vpack.c.bf16 %v214, %v207
    %v278 = vpack.c.bf16 %v222, %v215
    %v279 = vpack.c.bf16 %v223, %v216
    %v280 = vpack.c.bf16 %v224, %v217
    %v281 = vpack.c.bf16 %v225, %v218
    %v282 = vpack.c.bf16 %v226, %v219
    %v283 = vpack.c.bf16 %v227, %v220
    %v284 = vpack.c.bf16 %v228, %v221
    %v285 = vld [vmem:[#allocation5] sm:$0xff]
    %v286 = vld [vmem:[#allocation5 + $0x8] sm:$0xff]
    %v287 = vld [vmem:[#allocation5 + $0x10] sm:$0xff]
    %v288 = vld [vmem:[#allocation5 + $0x18] sm:$0xff]
    %v289 = vld [vmem:[#allocation5 + $0x20] sm:$0xff]
    %v290 = vld [vmem:[#allocation5 + $0x28] sm:$0xff]
    %v291 = vld [vmem:[#allocation5 + $0x30] sm:$0xff]
    %v292 = vld [vmem:[#allocation5 + $0x38] sm:$0xff]
    %v293 = vld [vmem:[#allocation5 + $0x40] sm:$0xff]
    %v294 = vld [vmem:[#allocation5 + $0x48] sm:$0xff]
    %v295 = vld [vmem:[#allocation5 + $0x50] sm:$0xff]
    %v296 = vld [vmem:[#allocation5 + $0x58] sm:$0xff]
    %v297 = vld [vmem:[#allocation5 + $0x60] sm:$0xff]
    %v298 = vld [vmem:[#allocation5 + $0x68] sm:$0xff]
    %v299 = vld [vmem:[#allocation5 + $0x70] sm:$0xff]
    %v300 = vld [vmem:[#allocation5 + $0x78] sm:$0xff]
    %v301 = vld [vmem:[#allocation5 + $0x80] sm:$0xff]
    %v302 = vld [vmem:[#allocation5 + $0x88] sm:$0xff]
    %v303 = vld [vmem:[#allocation5 + $0x90] sm:$0xff]
    %v304 = vld [vmem:[#allocation5 + $0x98] sm:$0xff]
    %v305 = vld [vmem:[#allocation5 + $0xa0] sm:$0xff]
    %v306 = vld [vmem:[#allocation5 + $0xa8] sm:$0xff]
    %v307 = vld [vmem:[#allocation5 + $0xb0] sm:$0xff]
    %v308 = vld [vmem:[#allocation5 + $0xb8] sm:$0xff]
    %v309 = vld [vmem:[#allocation5 + $0xc0] sm:$0xff]
    %v310 = vld [vmem:[#allocation5 + $0xc8] sm:$0xff]
    %v311 = vld [vmem:[#allocation5 + $0xd0] sm:$0xff]
    %v312 = vld [vmem:[#allocation5 + $0xd8] sm:$0xff]
    %v313 = vld [vmem:[#allocation5 + $0xe0] sm:$0xff]
    %v314 = vld [vmem:[#allocation5 + $0xe8] sm:$0xff]
    %v315 = vld [vmem:[#allocation5 + $0xf0] sm:$0xff]
    %v316 = vld [vmem:[#allocation5 + $0xf8] sm:$0xff]
    %v317 = vld [vmem:[#allocation5 + $0x100] sm:$0xff]
    %v318 = vld [vmem:[#allocation5 + $0x108] sm:$0xff]
    %v319 = vld [vmem:[#allocation5 + $0x110] sm:$0xff]
    %v320 = vld [vmem:[#allocation5 + $0x118] sm:$0xff]
    %v321 = vld [vmem:[#allocation5 + $0x120] sm:$0xff]
    %v322 = vld [vmem:[#allocation5 + $0x128] sm:$0xff]
    %v323 = vld [vmem:[#allocation5 + $0x130] sm:$0xff]
    %v324 = vld [vmem:[#allocation5 + $0x138] sm:$0xff]
    %v325 = vld [vmem:[#allocation5 + $0x140] sm:$0xff]
    %v326 = vld [vmem:[#allocation5 + $0x148] sm:$0xff]
    %v327 = vld [vmem:[#allocation5 + $0x150] sm:$0xff]
    %v328 = vld [vmem:[#allocation5 + $0x158] sm:$0xff]
    %v329 = vld [vmem:[#allocation5 + $0x160] sm:$0xff]
    %v330 = vld [vmem:[#allocation5 + $0x168] sm:$0xff]
    %v331 = vld [vmem:[#allocation5 + $0x170] sm:$0xff]
    %v332 = vld [vmem:[#allocation5 + $0x178] sm:$0xff]
    %v333 = vld [vmem:[#allocation5 + $0x180] sm:$0xff]
    %v334 = vld [vmem:[#allocation5 + $0x188] sm:$0xff]
    %v335 = vld [vmem:[#allocation5 + $0x190] sm:$0xff]
    %v336 = vld [vmem:[#allocation5 + $0x198] sm:$0xff]
    %v337 = vld [vmem:[#allocation5 + $0x1a0] sm:$0xff]
    %v338 = vld [vmem:[#allocation5 + $0x1a8] sm:$0xff]
    %v339 = vld [vmem:[#allocation5 + $0x1b0] sm:$0xff]
    %v340 = vld [vmem:[#allocation5 + $0x1b8] sm:$0xff]
    %v341 = vld [vmem:[#allocation5 + $0x1c0] sm:$0xff]
    %v342 = vld [vmem:[#allocation5 + $0x1c8] sm:$0xff]
    %v343 = vld [vmem:[#allocation5 + $0x1d0] sm:$0xff]
    %v344 = vld [vmem:[#allocation5 + $0x1d8] sm:$0xff]
    %v345 = vld [vmem:[#allocation5 + $0x1e0] sm:$0xff]
    %v346 = vld [vmem:[#allocation5 + $0x1e8] sm:$0xff]
    %v347 = vld [vmem:[#allocation5 + $0x1f0] sm:$0xff]
    %v348 = vld [vmem:[#allocation5 + $0x1f8] sm:$0xff]
    %v349 = vld [vmem:[#allocation5 + $0x200] sm:$0xff]
    %v350 = vld [vmem:[#allocation5 + $0x208] sm:$0xff]
    %v351 = vld [vmem:[#allocation5 + $0x210] sm:$0xff]
    %v352 = vld [vmem:[#allocation5 + $0x218] sm:$0xff]
    %v353 = vld [vmem:[#allocation5 + $0x220] sm:$0xff]
    %v354 = vld [vmem:[#allocation5 + $0x228] sm:$0xff]
    %v355 = vld [vmem:[#allocation5 + $0x230] sm:$0xff]
    %v356 = vld [vmem:[#allocation5 + $0x238] sm:$0xff]
    %v357 = vld [vmem:[#allocation5 + $0x240] sm:$0xff]
    %v358 = vld [vmem:[#allocation5 + $0x248] sm:$0xff]
    %v359 = vld [vmem:[#allocation5 + $0x250] sm:$0xff]
    %v360 = vld [vmem:[#allocation5 + $0x258] sm:$0xff]
    %v361 = vld [vmem:[#allocation5 + $0x260] sm:$0xff]
    %v362 = vld [vmem:[#allocation5 + $0x268] sm:$0xff]
    %v363 = vld [vmem:[#allocation5 + $0x270] sm:$0xff]
    %v364 = vld [vmem:[#allocation5 + $0x278] sm:$0xff]
    %v365 = vld [vmem:[#allocation5 + $0x280] sm:$0xff]
    %v366 = vld [vmem:[#allocation5 + $0x288] sm:$0xff]
    %v367 = vld [vmem:[#allocation5 + $0x290] sm:$0xff]
    %v368 = vld [vmem:[#allocation5 + $0x298] sm:$0xff]
    %v369 = vld [vmem:[#allocation5 + $0x2a0] sm:$0xff]
    %v370 = vld [vmem:[#allocation5 + $0x2a8] sm:$0xff]
    %v371 = vld [vmem:[#allocation5 + $0x2b0] sm:$0xff]
    %v372 = vld [vmem:[#allocation5 + $0x2b8] sm:$0xff]
    %v373 = vld [vmem:[#allocation5 + $0x2c0] sm:$0xff]
    %v374 = vld [vmem:[#allocation5 + $0x2c8] sm:$0xff]
    %v375 = vld [vmem:[#allocation5 + $0x2d0] sm:$0xff]
    %v376 = vld [vmem:[#allocation5 + $0x2d8] sm:$0xff]
    %v377 = vld [vmem:[#allocation5 + $0x2e0] sm:$0xff]
    %v378 = vld [vmem:[#allocation5 + $0x2e8] sm:$0xff]
    %v379 = vld [vmem:[#allocation5 + $0x2f0] sm:$0xff]
    %v380 = vld [vmem:[#allocation5 + $0x2f8] sm:$0xff]
    %v381 = vld [vmem:[#allocation5 + $0x300] sm:$0xff]
    %v382 = vld [vmem:[#allocation5 + $0x308] sm:$0xff]
    %v383 = vld [vmem:[#allocation7] sm:$0x3]
    %v385 = vlaneseq
    %v386 = vshrl.u32 %v385, 7
    %v387 = vsub.s32 0, %v386
    %v388 = vrot.slane %v383, %v387
    %v389 = vlaneseq
    %v390 = vshrl.u32 %v389, 7
    %v391 = vsub.s32 1, %v390
    %v392 = vrot.slane %v383, %v391
    %v493 = vunpack.c.l.b16 %v285
    %v494 = vunpack.c.h.b16 %v285
    %v495 = vunpack.c.l.b16 %v286
    %v496 = vunpack.c.h.b16 %v286
    %v497 = vunpack.c.l.b16 %v287
    %v498 = vunpack.c.h.b16 %v287
    %v499 = vunpack.c.l.b16 %v288
    %v500 = vunpack.c.h.b16 %v288
    %v501 = vunpack.c.l.b16 %v289
    %v502 = vunpack.c.h.b16 %v289
    %v503 = vunpack.c.l.b16 %v290
    %v504 = vunpack.c.h.b16 %v290
    %v505 = vunpack.c.l.b16 %v291
    %v506 = vunpack.c.h.b16 %v291
    %v507 = vunpack.c.l.b16 %v292
    %v508 = vunpack.c.h.b16 %v292
    %v509 = vunpack.c.l.b16 %v293
    %v510 = vunpack.c.h.b16 %v293
    %v511 = vunpack.c.l.b16 %v294
    %v512 = vunpack.c.h.b16 %v294
    %v513 = vunpack.c.l.b16 %v295
    %v514 = vunpack.c.h.b16 %v295
    %v515 = vunpack.c.l.b16 %v296
    %v516 = vunpack.c.h.b16 %v296
    %v517 = vunpack.c.l.b16 %v297
    %v518 = vunpack.c.h.b16 %v297
    %v519 = vunpack.c.l.b16 %v298
    %v520 = vunpack.c.h.b16 %v298
    %v521 = vunpack.c.l.b16 %v299
    %v522 = vunpack.c.h.b16 %v299
    %v523 = vunpack.c.l.b16 %v300
    %v524 = vunpack.c.h.b16 %v300
    %v525 = vunpack.c.l.b16 %v301
    %v526 = vunpack.c.h.b16 %v301
    %v527 = vunpack.c.l.b16 %v302
    %v528 = vunpack.c.h.b16 %v302
    %v529 = vunpack.c.l.b16 %v303
    %v530 = vunpack.c.h.b16 %v303
    %v531 = vunpack.c.l.b16 %v304
    %v532 = vunpack.c.h.b16 %v304
    %v533 = vunpack.c.l.b16 %v305
    %v534 = vunpack.c.h.b16 %v305
    %v535 = vunpack.c.l.b16 %v306
    %v536 = vunpack.c.h.b16 %v306
    %v537 = vunpack.c.l.b16 %v307
    %v538 = vunpack.c.h.b16 %v307
    %v539 = vunpack.c.l.b16 %v308
    %v540 = vunpack.c.h.b16 %v308
    %v541 = vunpack.c.l.b16 %v309
    %v542 = vunpack.c.h.b16 %v309
    %v543 = vunpack.c.l.b16 %v310
    %v544 = vunpack.c.h.b16 %v310
    %v545 = vunpack.c.l.b16 %v311
    %v546 = vunpack.c.h.b16 %v311
    %v547 = vunpack.c.l.b16 %v312
    %v548 = vunpack.c.h.b16 %v312
    %v549 = vunpack.c.l.b16 %v313
    %v550 = vunpack.c.h.b16 %v313
    %v551 = vunpack.c.l.b16 %v314
    %v552 = vunpack.c.h.b16 %v314
    %v553 = vunpack.c.l.b16 %v315
    %v554 = vunpack.c.h.b16 %v315
    %v555 = vunpack.c.l.b16 %v316
    %v556 = vunpack.c.h.b16 %v316
    %v557 = vunpack.c.l.b16 %v317
    %v558 = vunpack.c.h.b16 %v317
    %v559 = vunpack.c.l.b16 %v318
    %v560 = vunpack.c.h.b16 %v318
    %v561 = vunpack.c.l.b16 %v319
    %v562 = vunpack.c.h.b16 %v319
    %v563 = vunpack.c.l.b16 %v320
    %v564 = vunpack.c.h.b16 %v320
    %v565 = vunpack.c.l.b16 %v321
    %v566 = vunpack.c.h.b16 %v321
    %v567 = vunpack.c.l.b16 %v322
    %v568 = vunpack.c.h.b16 %v322
    %v569 = vunpack.c.l.b16 %v323
    %v570 = vunpack.c.h.b16 %v323
    %v571 = vunpack.c.l.b16 %v324
    %v572 = vunpack.c.h.b16 %v324
    %v573 = vunpack.c.l.b16 %v325
    %v574 = vunpack.c.h.b16 %v325
    %v575 = vunpack.c.l.b16 %v326
    %v576 = vunpack.c.h.b16 %v326
    %v577 = vunpack.c.l.b16 %v327
    %v578 = vunpack.c.h.b16 %v327
    %v579 = vunpack.c.l.b16 %v328
    %v580 = vunpack.c.h.b16 %v328
    %v581 = vunpack.c.l.b16 %v329
    %v582 = vunpack.c.h.b16 %v329
    %v583 = vunpack.c.l.b16 %v330
    %v584 = vunpack.c.h.b16 %v330
    %v585 = vunpack.c.l.b16 %v331
    %v586 = vunpack.c.h.b16 %v331
    %v587 = vunpack.c.l.b16 %v332
    %v588 = vunpack.c.h.b16 %v332
    %v589 = vunpack.c.l.b16 %v333
    %v590 = vunpack.c.h.b16 %v333
    %v591 = vunpack.c.l.b16 %v334
    %v592 = vunpack.c.h.b16 %v334
    %v593 = vunpack.c.l.b16 %v335
    %v594 = vunpack.c.h.b16 %v335
    %v595 = vunpack.c.l.b16 %v336
    %v596 = vunpack.c.h.b16 %v336
    %v597 = vunpack.c.l.b16 %v337
    %v598 = vunpack.c.h.b16 %v337
    %v599 = vunpack.c.l.b16 %v338
    %v600 = vunpack.c.h.b16 %v338
    %v601 = vunpack.c.l.b16 %v339
    %v602 = vunpack.c.h.b16 %v339
    %v603 = vunpack.c.l.b16 %v340
    %v604 = vunpack.c.h.b16 %v340
    %v605 = vunpack.c.l.b16 %v341
    %v606 = vunpack.c.h.b16 %v341
    %v607 = vunpack.c.l.b16 %v342
    %v608 = vunpack.c.h.b16 %v342
    %v609 = vunpack.c.l.b16 %v343
    %v610 = vunpack.c.h.b16 %v343
    %v611 = vunpack.c.l.b16 %v344
    %v612 = vunpack.c.h.b16 %v344
    %v613 = vunpack.c.l.b16 %v345
    %v614 = vunpack.c.h.b16 %v345
    %v615 = vunpack.c.l.b16 %v346
    %v616 = vunpack.c.h.b16 %v346
    %v617 = vunpack.c.l.b16 %v347
    %v618 = vunpack.c.h.b16 %v347
    %v619 = vunpack.c.l.b16 %v348
    %v620 = vunpack.c.h.b16 %v348
    %v621 = vunpack.c.l.b16 %v349
    %v622 = vunpack.c.h.b16 %v349
    %v623 = vunpack.c.l.b16 %v350
    %v624 = vunpack.c.h.b16 %v350
    %v625 = vunpack.c.l.b16 %v351
    %v626 = vunpack.c.h.b16 %v351
    %v627 = vunpack.c.l.b16 %v352
    %v628 = vunpack.c.h.b16 %v352
    %v629 = vunpack.c.l.b16 %v353
    %v630 = vunpack.c.h.b16 %v353
    %v631 = vunpack.c.l.b16 %v354
    %v632 = vunpack.c.h.b16 %v354
    %v633 = vunpack.c.l.b16 %v355
    %v634 = vunpack.c.h.b16 %v355
    %v635 = vunpack.c.l.b16 %v356
    %v636 = vunpack.c.h.b16 %v356
    %v637 = vunpack.c.l.b16 %v357
    %v638 = vunpack.c.h.b16 %v357
    %v639 = vunpack.c.l.b16 %v358
    %v640 = vunpack.c.h.b16 %v358
    %v641 = vunpack.c.l.b16 %v359
    %v642 = vunpack.c.h.b16 %v359
    %v643 = vunpack.c.l.b16 %v360
    %v644 = vunpack.c.h.b16 %v360
    %v645 = vunpack.c.l.b16 %v361
    %v646 = vunpack.c.h.b16 %v361
    %v647 = vunpack.c.l.b16 %v362
    %v648 = vunpack.c.h.b16 %v362
    %v649 = vunpack.c.l.b16 %v363
    %v650 = vunpack.c.h.b16 %v363
    %v651 = vunpack.c.l.b16 %v364
    %v652 = vunpack.c.h.b16 %v364
    %v653 = vunpack.c.l.b16 %v365
    %v654 = vunpack.c.h.b16 %v365
    %v655 = vunpack.c.l.b16 %v366
    %v656 = vunpack.c.h.b16 %v366
    %v657 = vunpack.c.l.b16 %v367
    %v658 = vunpack.c.h.b16 %v367
    %v659 = vunpack.c.l.b16 %v368
    %v660 = vunpack.c.h.b16 %v368
    %v661 = vunpack.c.l.b16 %v369
    %v662 = vunpack.c.h.b16 %v369
    %v663 = vunpack.c.l.b16 %v370
    %v664 = vunpack.c.h.b16 %v370
    %v665 = vunpack.c.l.b16 %v371
    %v666 = vunpack.c.h.b16 %v371
    %v667 = vunpack.c.l.b16 %v372
    %v668 = vunpack.c.h.b16 %v372
    %v669 = vunpack.c.l.b16 %v373
    %v670 = vunpack.c.h.b16 %v373
    %v671 = vunpack.c.l.b16 %v374
    %v672 = vunpack.c.h.b16 %v374
    %v673 = vunpack.c.l.b16 %v375
    %v674 = vunpack.c.h.b16 %v375
    %v675 = vunpack.c.l.b16 %v376
    %v676 = vunpack.c.h.b16 %v376
    %v677 = vunpack.c.l.b16 %v377
    %v678 = vunpack.c.h.b16 %v377
    %v679 = vunpack.c.l.b16 %v378
    %v680 = vunpack.c.h.b16 %v378
    %v681 = vunpack.c.l.b16 %v379
    %v682 = vunpack.c.h.b16 %v379
    %v683 = vunpack.c.l.b16 %v380
    %v684 = vunpack.c.h.b16 %v380
    %v685 = vunpack.c.l.b16 %v381
    %v686 = vunpack.c.h.b16 %v381
    %v687 = vunpack.c.l.b16 %v382
    %v688 = vunpack.c.h.b16 %v382
    %v689 = vpack.c.b16 %v495, %v493
    %v690 = vpack.c.b16 %v496, %v494
    %v691 = vpack.c.b16 %v499, %v497
    %v692 = vpack.c.b16 %v500, %v498
    %v693 = vpack.c.b16 %v503, %v501
    %v694 = vpack.c.b16 %v504, %v502
    %v695 = vpack.c.b16 %v507, %v505
    %v696 = vpack.c.b16 %v508, %v506
    %v697 = vpack.c.b16 %v511, %v509
    %v698 = vpack.c.b16 %v512, %v510
    %v699 = vpack.c.b16 %v515, %v513
    %v700 = vpack.c.b16 %v516, %v514
    %v701 = vpack.c.b16 %v519, %v517
    %v702 = vpack.c.b16 %v520, %v518
    %v703 = vpack.c.b16 %v523, %v521
    %v704 = vpack.c.b16 %v524, %v522
    %v705 = vpack.c.b16 %v527, %v525
    %v706 = vpack.c.b16 %v528, %v526
    %v707 = vpack.c.b16 %v531, %v529
    %v708 = vpack.c.b16 %v532, %v530
    %v709 = vpack.c.b16 %v535, %v533
    %v710 = vpack.c.b16 %v536, %v534
    %v711 = vpack.c.b16 %v539, %v537
    %v712 = vpack.c.b16 %v540, %v538
    %v713 = vpack.c.b16 %v543, %v541
    %v714 = vpack.c.b16 %v544, %v542
    %v715 = vpack.c.b16 %v547, %v545
    %v716 = vpack.c.b16 %v548, %v546
    %v717 = vpack.c.b16 %v551, %v549
    %v718 = vpack.c.b16 %v552, %v550
    %v719 = vpack.c.b16 %v555, %v553
    %v720 = vpack.c.b16 %v556, %v554
    %v721 = vpack.c.b16 %v559, %v557
    %v722 = vpack.c.b16 %v560, %v558
    %v723 = vpack.c.b16 %v563, %v561
    %v724 = vpack.c.b16 %v564, %v562
    %v725 = vpack.c.b16 %v567, %v565
    %v726 = vpack.c.b16 %v568, %v566
    %v727 = vpack.c.b16 %v571, %v569
    %v728 = vpack.c.b16 %v572, %v570
    %v729 = vpack.c.b16 %v575, %v573
    %v730 = vpack.c.b16 %v576, %v574
    %v731 = vpack.c.b16 %v579, %v577
    %v732 = vpack.c.b16 %v580, %v578
    %v733 = vpack.c.b16 %v583, %v581
    %v734 = vpack.c.b16 %v584, %v582
    %v735 = vpack.c.b16 %v587, %v585
    %v736 = vpack.c.b16 %v588, %v586
    %v737 = vpack.c.b16 %v591, %v589
    %v738 = vpack.c.b16 %v592, %v590
    %v739 = vpack.c.b16 %v595, %v593
    %v740 = vpack.c.b16 %v596, %v594
    %v741 = vpack.c.b16 %v599, %v597
    %v742 = vpack.c.b16 %v600, %v598
    %v743 = vpack.c.b16 %v603, %v601
    %v744 = vpack.c.b16 %v604, %v602
    %v745 = vpack.c.b16 %v607, %v605
    %v746 = vpack.c.b16 %v608, %v606
    %v747 = vpack.c.b16 %v611, %v609
    %v748 = vpack.c.b16 %v612, %v610
    %v749 = vpack.c.b16 %v615, %v613
    %v750 = vpack.c.b16 %v616, %v614
    %v751 = vpack.c.b16 %v619, %v617
    %v752 = vpack.c.b16 %v620, %v618
    %v753 = vpack.c.b16 %v623, %v621
    %v754 = vpack.c.b16 %v624, %v622
    %v755 = vpack.c.b16 %v627, %v625
    %v756 = vpack.c.b16 %v628, %v626
    %v757 = vpack.c.b16 %v631, %v629
    %v758 = vpack.c.b16 %v632, %v630
    %v759 = vpack.c.b16 %v635, %v633
    %v760 = vpack.c.b16 %v636, %v634
    %v761 = vpack.c.b16 %v639, %v637
    %v762 = vpack.c.b16 %v640, %v638
    %v763 = vpack.c.b16 %v643, %v641
    %v764 = vpack.c.b16 %v644, %v642
    %v765 = vpack.c.b16 %v647, %v645
    %v766 = vpack.c.b16 %v648, %v646
    %v767 = vpack.c.b16 %v651, %v649
    %v768 = vpack.c.b16 %v652, %v650
    %v769 = vpack.c.b16 %v655, %v653
    %v770 = vpack.c.b16 %v656, %v654
    %v771 = vpack.c.b16 %v659, %v657
    %v772 = vpack.c.b16 %v660, %v658
    %v773 = vpack.c.b16 %v663, %v661
    %v774 = vpack.c.b16 %v664, %v662
    %v775 = vpack.c.b16 %v667, %v665
    %v776 = vpack.c.b16 %v668, %v666
    %v777 = vpack.c.b16 %v671, %v669
    %v778 = vpack.c.b16 %v672, %v670
    %v779 = vpack.c.b16 %v675, %v673
    %v780 = vpack.c.b16 %v676, %v674
    %v781 = vpack.c.b16 %v679, %v677
    %v782 = vpack.c.b16 %v680, %v678
    %v783 = vpack.c.b16 %v683, %v681
    %v784 = vpack.c.b16 %v684, %v682
    %v785 = vpack.c.b16 %v687, %v685
    %v786 = vpack.c.b16 %v688, %v686
    %vm885 = vcmask 130048
    %v887 = vsel %vm885, %v235, 0
    %v890 = vsel %vm885, %v242, 0
    %v893 = vsel %vm885, %v249, 0
    %v896 = vsel %vm885, %v256, 0
    %v899 = vsel %vm885, %v263, 0
    %v902 = vsel %vm885, %v270, 0
    %v905 = vsel %vm885, %v277, 0
    %v908 = vsel %vm885, %v284, 0
    %910 = vmatprep.subr.bf16.mxu0 %v690
    %911 = vmatpush1.bf16.msra.mxu0 %v689
    %912 = vmatprep.subr.bf16.mxu0 %v692
    %913 = vmatpush1.bf16.msra.mxu0 %v691
    %914 = vmatprep.subr.bf16.mxu0 %v694
    %915 = vmatpush1.bf16.msra.mxu0 %v693
    %916 = vmatprep.subr.bf16.mxu0 %v696
    %917 = vmatpush1.bf16.msra.mxu0 %v695
    %918 = vmatprep.subr.bf16.mxu0 %v698
    %919 = vmatpush1.bf16.msra.mxu0 %v697
    %920 = vmatprep.subr.bf16.mxu0 %v700
    %921 = vmatpush1.bf16.msra.mxu0 %v699
    %922 = vmatprep.subr.bf16.mxu0 %v702
    %923 = vmatpush1.bf16.msra.mxu0 %v701
    %924 = vmatprep.subr.bf16.mxu0 %v704
    %925 = vmatpush1.bf16.msra.mxu0 %v703
    %926 = vmatprep.subr.bf16.mxu0 %v706
    %927 = vmatpush1.bf16.msra.mxu0 %v705
    %928 = vmatprep.subr.bf16.mxu0 %v708
    %929 = vmatpush1.bf16.msra.mxu0 %v707
    %930 = vmatprep.subr.bf16.mxu0 %v710
    %931 = vmatpush1.bf16.msra.mxu0 %v709
    %932 = vmatprep.subr.bf16.mxu0 %v712
    %933 = vmatpush1.bf16.msra.mxu0 %v711
    %934 = vmatprep.subr.bf16.mxu0 %v714
    %935 = vmatpush1.bf16.msra.mxu0 %v713
    %936 = vmatprep.subr.bf16.mxu0 %v716
    %937 = vmatpush1.bf16.msra.mxu0 %v715
    %938 = vmatprep.subr.bf16.mxu0 %v718
    %939 = vmatpush1.bf16.msra.mxu0 %v717
    %940 = vmatprep.subr.bf16.mxu0 %v720
    %941 = vmatpush1.bf16.msra.mxu0 %v719
    %942 = vmatprep.mubr.bf16.mxu0 %v230
    %943 = vmatmul.mubr.bf16.gmra.mrb[0].mxu0 %v229
    %v944 = vpop.f32.mrb[0].mxu0
    %v945 = vadd.f32 %v388, %v944
    %v946 = vpop.f32.mrb[0].mxu0
    %v947 = vadd.f32 %v392, %v946
    %v948 = vpop.f32.mrb[0].mxu0
    %v949 = vadd.f32 %v388, %v948
    %v950 = vpop.f32.mrb[0].mxu0
    %v951 = vadd.f32 %v392, %v950
    %952 = vmatprep.mubr.bf16.mxu0 %v237
    %953 = vmatmul.mubr.bf16.gmra.mrb[0].mxu0 %v236
    %v954 = vpop.f32.mrb[0].mxu0
    %v955 = vadd.f32 %v388, %v954
    %v956 = vpop.f32.mrb[0].mxu0
    %v957 = vadd.f32 %v392, %v956
    %v958 = vpop.f32.mrb[0].mxu0
    %v959 = vadd.f32 %v388, %v958
    %v960 = vpop.f32.mrb[0].mxu0
    %v961 = vadd.f32 %v392, %v960
    %962 = vmatprep.mubr.bf16.mxu0 %v244
    %963 = vmatmul.mubr.bf16.gmra.mrb[0].mxu0 %v243
    %v964 = vpop.f32.mrb[0].mxu0
    %v965 = vadd.f32 %v388, %v964
    %v966 = vpop.f32.mrb[0].mxu0
    %v967 = vadd.f32 %v392, %v966
    %v968 = vpop.f32.mrb[0].mxu0
    %v969 = vadd.f32 %v388, %v968
    %v970 = vpop.f32.mrb[0].mxu0
    %v971 = vadd.f32 %v392, %v970
    %972 = vmatprep.mubr.bf16.mxu0 %v251
    %973 = vmatmul.mubr.bf16.gmra.mrb[0].mxu0 %v250
    %v974 = vpop.f32.mrb[0].mxu0
    %v975 = vadd.f32 %v388, %v974
    %v976 = vpop.f32.mrb[0].mxu0
    %v977 = vadd.f32 %v392, %v976
    %v978 = vpop.f32.mrb[0].mxu0
    %v979 = vadd.f32 %v388, %v978
    %v980 = vpop.f32.mrb[0].mxu0
    %v981 = vadd.f32 %v392, %v980
    %982 = vmatprep.mubr.bf16.mxu0 %v258
    %983 = vmatmul.mubr.bf16.gmra.mrb[0].mxu0 %v257
    %v984 = vpop.f32.mrb[0].mxu0
    %v985 = vadd.f32 %v388, %v984
    %v986 = vpop.f32.mrb[0].mxu0
    %v987 = vadd.f32 %v392, %v986
    %v988 = vpop.f32.mrb[0].mxu0
    %v989 = vadd.f32 %v388, %v988
    %v990 = vpop.f32.mrb[0].mxu0
    %v991 = vadd.f32 %v392, %v990
    %992 = vmatprep.mubr.bf16.mxu0 %v265
    %993 = vmatmul.mubr.bf16.gmra.mrb[0].mxu0 %v264
    %v994 = vpop.f32.mrb[0].mxu0
    %v995 = vadd.f32 %v388, %v994
    %v996 = vpop.f32.mrb[0].mxu0
    %v997 = vadd.f32 %v392, %v996
    %v998 = vpop.f32.mrb[0].mxu0
    %v999 = vadd.f32 %v388, %v998
    %v1000 = vpop.f32.mrb[0].mxu0
    %v1001 = vadd.f32 %v392, %v1000
    %1002 = vmatprep.mubr.bf16.mxu0 %v272
    %1003 = vmatmul.mubr.bf16.gmra.mrb[0].mxu0 %v271
    %v1004 = vpop.f32.mrb[0].mxu0
    %v1005 = vadd.f32 %v388, %v1004
    %v1006 = vpop.f32.mrb[0].mxu0
    %v1007 = vadd.f32 %v392, %v1006
    %v1008 = vpop.f32.mrb[0].mxu0
    %v1009 = vadd.f32 %v388, %v1008
    %v1010 = vpop.f32.mrb[0].mxu0
    %v1011 = vadd.f32 %v392, %v1010
    %1012 = vmatprep.mubr.bf16.mxu0 %v279
    %1013 = vmatmul.mubr.bf16.gmra.mrb[0].mxu0 %v278
    %v1014 = vpop.f32.mrb[0].mxu0
    %v1015 = vadd.f32 %v388, %v1014
    %v1016 = vpop.f32.mrb[0].mxu0
    %v1017 = vadd.f32 %v392, %v1016
    %v1018 = vpop.f32.mrb[0].mxu0
    %v1019 = vadd.f32 %v388, %v1018
    %v1020 = vpop.f32.mrb[0].mxu0
    %v1021 = vadd.f32 %v392, %v1020
    %1022 = vdwg.mxu0
    %1023 = vmatprep.subr.bf16.mxu0 %v722
    %1024 = vmatpush1.bf16.msra.mxu0 %v721
    %1025 = vmatprep.subr.bf16.mxu0 %v724
    %1026 = vmatpush1.bf16.msra.mxu0 %v723
    %1027 = vmatprep.subr.bf16.mxu0 %v726
    %1028 = vmatpush1.bf16.msra.mxu0 %v725
    %1029 = vmatprep.subr.bf16.mxu0 %v728
    %1030 = vmatpush1.bf16.msra.mxu0 %v727
    %1031 = vmatprep.subr.bf16.mxu0 %v730
    %1032 = vmatpush1.bf16.msra.mxu0 %v729
    %1033 = vmatprep.subr.bf16.mxu0 %v732
    %1034 = vmatpush1.bf16.msra.mxu0 %v731
    %1035 = vmatprep.subr.bf16.mxu0 %v734
    %1036 = vmatpush1.bf16.msra.mxu0 %v733
    %1037 = vmatprep.subr.bf16.mxu0 %v736
    %1038 = vmatpush1.bf16.msra.mxu0 %v735
    %1039 = vmatprep.subr.bf16.mxu0 %v738
    %1040 = vmatpush1.bf16.msra.mxu0 %v737
    %1041 = vmatprep.subr.bf16.mxu0 %v740
    %1042 = vmatpush1.bf16.msra.mxu0 %v739
    %1043 = vmatprep.subr.bf16.mxu0 %v742
    %1044 = vmatpush1.bf16.msra.mxu0 %v741
    %1045 = vmatprep.subr.bf16.mxu0 %v744
    %1046 = vmatpush1.bf16.msra.mxu0 %v743
    %1047 = vmatprep.subr.bf16.mxu0 %v746
    %1048 = vmatpush1.bf16.msra.mxu0 %v745
    %1049 = vmatprep.subr.bf16.mxu0 %v748
    %1050 = vmatpush1.bf16.msra.mxu0 %v747
    %1051 = vmatprep.subr.bf16.mxu0 %v750
    %1052 = vmatpush1.bf16.msra.mxu0 %v749
    %1053 = vmatprep.subr.bf16.mxu0 %v752
    %1054 = vmatpush1.bf16.msra.mxu0 %v751
    %1055 = vmatprep.mubr.bf16.mxu0 %v232
    %1056 = vmatmul.mubr.bf16.gmra.mrb[0].mxu0 %v231
    %v1057 = vpop.f32.mrb[0].mxu0
    %v1058 = vadd.f32 %v945, %v1057
    %v1059 = vpop.f32.mrb[0].mxu0
    %v1060 = vadd.f32 %v947, %v1059
    %v1061 = vpop.f32.mrb[0].mxu0
    %v1062 = vadd.f32 %v949, %v1061
    %v1063 = vpop.f32.mrb[0].mxu0
    %v1064 = vadd.f32 %v951, %v1063
    %1065 = vmatprep.mubr.bf16.mxu0 %v239
    %1066 = vmatmul.mubr.bf16.gmra.mrb[0].mxu0 %v238
    %v1067 = vpop.f32.mrb[0].mxu0
    %v1068 = vadd.f32 %v955, %v1067
    %v1069 = vpop.f32.mrb[0].mxu0
    %v1070 = vadd.f32 %v957, %v1069
    %v1071 = vpop.f32.mrb[0].mxu0
    %v1072 = vadd.f32 %v959, %v1071
    %v1073 = vpop.f32.mrb[0].mxu0
    %v1074 = vadd.f32 %v961, %v1073
    %1075 = vmatprep.mubr.bf16.mxu0 %v246
    %1076 = vmatmul.mubr.bf16.gmra.mrb[0].mxu0 %v245
    %v1077 = vpop.f32.mrb[0].mxu0
    %v1078 = vadd.f32 %v965, %v1077
    %v1079 = vpop.f32.mrb[0].mxu0
    %v1080 = vadd.f32 %v967, %v1079
    %v1081 = vpop.f32.mrb[0].mxu0
    %v1082 = vadd.f32 %v969, %v1081
    %v1083 = vpop.f32.mrb[0].mxu0
    %v1084 = vadd.f32 %v971, %v1083
    %1085 = vmatprep.mubr.bf16.mxu0 %v253
    %1086 = vmatmul.mubr.bf16.gmra.mrb[0].mxu0 %v252
    %v1087 = vpop.f32.mrb[0].mxu0
    %v1088 = vadd.f32 %v975, %v1087
    %v1089 = vpop.f32.mrb[0].mxu0
    %v1090 = vadd.f32 %v977, %v1089
    %v1091 = vpop.f32.mrb[0].mxu0
    %v1092 = vadd.f32 %v979, %v1091
    %v1093 = vpop.f32.mrb[0].mxu0
    %v1094 = vadd.f32 %v981, %v1093
    %1095 = vmatprep.mubr.bf16.mxu0 %v260
    %1096 = vmatmul.mubr.bf16.gmra.mrb[0].mxu0 %v259
    %v1097 = vpop.f32.mrb[0].mxu0
    %v1098 = vadd.f32 %v985, %v1097
    %v1099 = vpop.f32.mrb[0].mxu0
    %v1100 = vadd.f32 %v987, %v1099
    %v1101 = vpop.f32.mrb[0].mxu0
    %v1102 = vadd.f32 %v989, %v1101
    %v1103 = vpop.f32.mrb[0].mxu0
    %v1104 = vadd.f32 %v991, %v1103
    %1105 = vmatprep.mubr.bf16.mxu0 %v267
    %1106 = vmatmul.mubr.bf16.gmra.mrb[0].mxu0 %v266
    %v1107 = vpop.f32.mrb[0].mxu0
    %v1108 = vadd.f32 %v995, %v1107
    %v1109 = vpop.f32.mrb[0].mxu0
    %v1110 = vadd.f32 %v997, %v1109
    %v1111 = vpop.f32.mrb[0].mxu0
    %v1112 = vadd.f32 %v999, %v1111
    %v1113 = vpop.f32.mrb[0].mxu0
    %v1114 = vadd.f32 %v1001, %v1113
    %1115 = vmatprep.mubr.bf16.mxu0 %v274
    %1116 = vmatmul.mubr.bf16.gmra.mrb[0].mxu0 %v273
    %v1117 = vpop.f32.mrb[0].mxu0
    %v1118 = vadd.f32 %v1005, %v1117
    %v1119 = vpop.f32.mrb[0].mxu0
    %v1120 = vadd.f32 %v1007, %v1119
    %v1121 = vpop.f32.mrb[0].mxu0
    %v1122 = vadd.f32 %v1009, %v1121
    %v1123 = vpop.f32.mrb[0].mxu0
    %v1124 = vadd.f32 %v1011, %v1123
    %1125 = vmatprep.mubr.bf16.mxu0 %v281
    %1126 = vmatmul.mubr.bf16.gmra.mrb[0].mxu0 %v280
    %v1127 = vpop.f32.mrb[0].mxu0
    %v1128 = vadd.f32 %v1015, %v1127
    %v1129 = vpop.f32.mrb[0].mxu0
    %v1130 = vadd.f32 %v1017, %v1129
    %v1131 = vpop.f32.mrb[0].mxu0
    %v1132 = vadd.f32 %v1019, %v1131
    %v1133 = vpop.f32.mrb[0].mxu0
    %v1134 = vadd.f32 %v1021, %v1133
    %1135 = vdwg.mxu0
    %1136 = vmatprep.subr.bf16.mxu0 %v754
    %1137 = vmatpush1.bf16.msra.mxu0 %v753
    %1138 = vmatprep.subr.bf16.mxu0 %v756
    %1139 = vmatpush1.bf16.msra.mxu0 %v755
    %1140 = vmatprep.subr.bf16.mxu0 %v758
    %1141 = vmatpush1.bf16.msra.mxu0 %v757
    %1142 = vmatprep.subr.bf16.mxu0 %v760
    %1143 = vmatpush1.bf16.msra.mxu0 %v759
    %1144 = vmatprep.subr.bf16.mxu0 %v762
    %1145 = vmatpush1.bf16.msra.mxu0 %v761
    %1146 = vmatprep.subr.bf16.mxu0 %v764
    %1147 = vmatpush1.bf16.msra.mxu0 %v763
    %1148 = vmatprep.subr.bf16.mxu0 %v766
    %1149 = vmatpush1.bf16.msra.mxu0 %v765
    %1150 = vmatprep.subr.bf16.mxu0 %v768
    %1151 = vmatpush1.bf16.msra.mxu0 %v767
    %1152 = vmatprep.subr.bf16.mxu0 %v770
    %1153 = vmatpush1.bf16.msra.mxu0 %v769
    %1154 = vmatprep.subr.bf16.mxu0 %v772
    %1155 = vmatpush1.bf16.msra.mxu0 %v771
    %1156 = vmatprep.subr.bf16.mxu0 %v774
    %1157 = vmatpush1.bf16.msra.mxu0 %v773
    %1158 = vmatprep.subr.bf16.mxu0 %v776
    %1159 = vmatpush1.bf16.msra.mxu0 %v775
    %1160 = vmatprep.subr.bf16.mxu0 %v778
    %1161 = vmatpush1.bf16.msra.mxu0 %v777
    %1162 = vmatprep.subr.bf16.mxu0 %v780
    %1163 = vmatpush1.bf16.msra.mxu0 %v779
    %1164 = vmatprep.subr.bf16.mxu0 %v782
    %1165 = vmatpush1.bf16.msra.mxu0 %v781
    %1166 = vmatprep.subr.bf16.mxu0 %v784
    %1167 = vmatpush1.bf16.msra.mxu0 %v783
    %1168 = vmatprep.mubr.bf16.mxu0 %v234
    %1169 = vmatmul.mubr.bf16.gmra.mrb[0].mxu0 %v233
    %v1170 = vpop.f32.mrb[0].mxu0
    %v1171 = vadd.f32 %v1058, %v1170
    %v1172 = vpop.f32.mrb[0].mxu0
    %v1173 = vadd.f32 %v1060, %v1172
    %v1174 = vpop.f32.mrb[0].mxu0
    %v1175 = vadd.f32 %v1062, %v1174
    %v1176 = vpop.f32.mrb[0].mxu0
    %v1177 = vadd.f32 %v1064, %v1176
    %1178 = vmatprep.mubr.bf16.mxu0 %v241
    %1179 = vmatmul.mubr.bf16.gmra.mrb[0].mxu0 %v240
    %v1180 = vpop.f32.mrb[0].mxu0
    %v1181 = vadd.f32 %v1068, %v1180
    %v1182 = vpop.f32.mrb[0].mxu0
    %v1183 = vadd.f32 %v1070, %v1182
    %v1184 = vpop.f32.mrb[0].mxu0
    %v1185 = vadd.f32 %v1072, %v1184
    %v1186 = vpop.f32.mrb[0].mxu0
    %v1187 = vadd.f32 %v1074, %v1186
    %1188 = vmatprep.mubr.bf16.mxu0 %v248
    %1189 = vmatmul.mubr.bf16.gmra.mrb[0].mxu0 %v247
    %v1190 = vpop.f32.mrb[0].mxu0
    %v1191 = vadd.f32 %v1078, %v1190
    %v1192 = vpop.f32.mrb[0].mxu0
    %v1193 = vadd.f32 %v1080, %v1192
    %v1194 = vpop.f32.mrb[0].mxu0
    %v1195 = vadd.f32 %v1082, %v1194
    %v1196 = vpop.f32.mrb[0].mxu0
    %v1197 = vadd.f32 %v1084, %v1196
    %1198 = vmatprep.mubr.bf16.mxu0 %v255
    %1199 = vmatmul.mubr.bf16.gmra.mrb[0].mxu0 %v254
    %v1200 = vpop.f32.mrb[0].mxu0
    %v1201 = vadd.f32 %v1088, %v1200
    %v1202 = vpop.f32.mrb[0].mxu0
    %v1203 = vadd.f32 %v1090, %v1202
    %v1204 = vpop.f32.mrb[0].mxu0
    %v1205 = vadd.f32 %v1092, %v1204
    %v1206 = vpop.f32.mrb[0].mxu0
    %v1207 = vadd.f32 %v1094, %v1206
    %1208 = vmatprep.mubr.bf16.mxu0 %v262
    %1209 = vmatmul.mubr.bf16.gmra.mrb[0].mxu0 %v261
    %v1210 = vpop.f32.mrb[0].mxu0
    %v1211 = vadd.f32 %v1098, %v1210
    %v1212 = vpop.f32.mrb[0].mxu0
    %v1213 = vadd.f32 %v1100, %v1212
    %v1214 = vpop.f32.mrb[0].mxu0
    %v1215 = vadd.f32 %v1102, %v1214
    %v1216 = vpop.f32.mrb[0].mxu0
    %v1217 = vadd.f32 %v1104, %v1216
    %1218 = vmatprep.mubr.bf16.mxu0 %v269
    %1219 = vmatmul.mubr.bf16.gmra.mrb[0].mxu0 %v268
    %v1220 = vpop.f32.mrb[0].mxu0
    %v1221 = vadd.f32 %v1108, %v1220
    %v1222 = vpop.f32.mrb[0].mxu0
    %v1223 = vadd.f32 %v1110, %v1222
    %v1224 = vpop.f32.mrb[0].mxu0
    %v1225 = vadd.f32 %v1112, %v1224
    %v1226 = vpop.f32.mrb[0].mxu0
    %v1227 = vadd.f32 %v1114, %v1226
    %1228 = vmatprep.mubr.bf16.mxu0 %v276
    %1229 = vmatmul.mubr.bf16.gmra.mrb[0].mxu0 %v275
    %v1230 = vpop.f32.mrb[0].mxu0
    %v1231 = vadd.f32 %v1118, %v1230
    %v1232 = vpop.f32.mrb[0].mxu0
    %v1233 = vadd.f32 %v1120, %v1232
    %v1234 = vpop.f32.mrb[0].mxu0
    %v1235 = vadd.f32 %v1122, %v1234
    %v1236 = vpop.f32.mrb[0].mxu0
    %v1237 = vadd.f32 %v1124, %v1236
    %1238 = vmatprep.mubr.bf16.mxu0 %v283
    %1239 = vmatmul.mubr.bf16.gmra.mrb[0].mxu0 %v282
    %v1240 = vpop.f32.mrb[0].mxu0
    %v1241 = vadd.f32 %v1128, %v1240
    %v1242 = vpop.f32.mrb[0].mxu0
    %v1243 = vadd.f32 %v1130, %v1242
    %v1244 = vpop.f32.mrb[0].mxu0
    %v1245 = vadd.f32 %v1132, %v1244
    %v1246 = vpop.f32.mrb[0].mxu0
    %v1247 = vadd.f32 %v1134, %v1246
    %1248 = vdwg.mxu0
    %1249 = vmatprep.subr.bf16.mxu0 %v786
    %1250 = vmatpush1.bf16.msra.mxu0 %v785
    %1251 = vmatprep.subr.bf16.mxu0 0
    %1252 = vmatpush1.bf16.msra.mxu0 0
    %1253 = vmatprep.subr.bf16.mxu0 0
    %1254 = vmatpush1.bf16.msra.mxu0 0
    %1255 = vmatprep.subr.bf16.mxu0 0
    %1256 = vmatpush1.bf16.msra.mxu0 0
    %1257 = vmatprep.subr.bf16.mxu0 0
    %1258 = vmatpush1.bf16.msra.mxu0 0
    %1259 = vmatprep.subr.bf16.mxu0 0
    %1260 = vmatpush1.bf16.msra.mxu0 0
    %1261 = vmatprep.subr.bf16.mxu0 0
    %1262 = vmatpush1.bf16.msra.mxu0 0
    %1263 = vmatprep.subr.bf16.mxu0 0
    %1264 = vmatpush1.bf16.msra.mxu0 0
    %1265 = vmatprep.subr.bf16.mxu0 0
    %1266 = vmatpush1.bf16.msra.mxu0 0
    %1267 = vmatprep.subr.bf16.mxu0 0
    %1268 = vmatpush1.bf16.msra.mxu0 0
    %1269 = vmatprep.subr.bf16.mxu0 0
    %1270 = vmatpush1.bf16.msra.mxu0 0
    %1271 = vmatprep.subr.bf16.mxu0 0
    %1272 = vmatpush1.bf16.msra.mxu0 0
    %1273 = vmatprep.subr.bf16.mxu0 0
    %1274 = vmatpush1.bf16.msra.mxu0 0
    %1275 = vmatprep.subr.bf16.mxu0 0
    %1276 = vmatpush1.bf16.msra.mxu0 0
    %1277 = vmatprep.subr.bf16.mxu0 0
    %1278 = vmatpush1.bf16.msra.mxu0 0
    %1279 = vmatprep.subr.bf16.mxu0 0
    %1280 = vmatpush1.bf16.msra.mxu0 0
    %1281 = vmatprep.mubr.bf16.mxu0 0
    %1282 = vmatmul.mubr.bf16.gmra.mrb[0].mxu0 %v887
    %v1283 = vpop.f32.mrb[0].mxu0
    %v1284 = vadd.f32 %v1171, %v1283
    %v1285 = vpop.f32.mrb[0].mxu0
    %v1286 = vadd.f32 %v1173, %v1285
    %v1287 = vpop.f32.mrb[0].mxu0
    %v1288 = vadd.f32 %v1175, %v1287
    %v1289 = vpop.f32.mrb[0].mxu0
    %v1290 = vadd.f32 %v1177, %v1289
    %1291 = vmatprep.mubr.bf16.mxu0 0
    %1292 = vmatmul.mubr.bf16.gmra.mrb[0].mxu0 %v890
    %v1293 = vpop.f32.mrb[0].mxu0
    %v1294 = vadd.f32 %v1181, %v1293
    %v1295 = vpop.f32.mrb[0].mxu0
    %v1296 = vadd.f32 %v1183, %v1295
    %v1297 = vpop.f32.mrb[0].mxu0
    %v1298 = vadd.f32 %v1185, %v1297
    %v1299 = vpop.f32.mrb[0].mxu0
    %v1300 = vadd.f32 %v1187, %v1299
    %1301 = vmatprep.mubr.bf16.mxu0 0
    %1302 = vmatmul.mubr.bf16.gmra.mrb[0].mxu0 %v893
    %v1303 = vpop.f32.mrb[0].mxu0
    %v1304 = vadd.f32 %v1191, %v1303
    %v1305 = vpop.f32.mrb[0].mxu0
    %v1306 = vadd.f32 %v1193, %v1305
    %v1307 = vpop.f32.mrb[0].mxu0
    %v1308 = vadd.f32 %v1195, %v1307
    %v1309 = vpop.f32.mrb[0].mxu0
    %v1310 = vadd.f32 %v1197, %v1309
    %1311 = vmatprep.mubr.bf16.mxu0 0
    %1312 = vmatmul.mubr.bf16.gmra.mrb[0].mxu0 %v896
    %v1313 = vpop.f32.mrb[0].mxu0
    %v1314 = vadd.f32 %v1201, %v1313
    %v1315 = vpop.f32.mrb[0].mxu0
    %v1316 = vadd.f32 %v1203, %v1315
    %v1317 = vpop.f32.mrb[0].mxu0
    %v1318 = vadd.f32 %v1205, %v1317
    %v1319 = vpop.f32.mrb[0].mxu0
    %v1320 = vadd.f32 %v1207, %v1319
    %1321 = vmatprep.mubr.bf16.mxu0 0
    %1322 = vmatmul.mubr.bf16.gmra.mrb[0].mxu0 %v899
    %v1323 = vpop.f32.mrb[0].mxu0
    %v1324 = vadd.f32 %v1211, %v1323
    %v1325 = vpop.f32.mrb[0].mxu0
    %v1326 = vadd.f32 %v1213, %v1325
    %v1327 = vpop.f32.mrb[0].mxu0
    %v1328 = vadd.f32 %v1215, %v1327
    %v1329 = vpop.f32.mrb[0].mxu0
    %v1330 = vadd.f32 %v1217, %v1329
    %1331 = vmatprep.mubr.bf16.mxu0 0
    %1332 = vmatmul.mubr.bf16.gmra.mrb[0].mxu0 %v902
    %v1333 = vpop.f32.mrb[0].mxu0
    %v1334 = vadd.f32 %v1221, %v1333
    %v1335 = vpop.f32.mrb[0].mxu0
    %v1336 = vadd.f32 %v1223, %v1335
    %v1337 = vpop.f32.mrb[0].mxu0
    %v1338 = vadd.f32 %v1225, %v1337
    %v1339 = vpop.f32.mrb[0].mxu0
    %v1340 = vadd.f32 %v1227, %v1339
    %1341 = vmatprep.mubr.bf16.mxu0 0
    %1342 = vmatmul.mubr.bf16.gmra.mrb[0].mxu0 %v905
    %v1343 = vpop.f32.mrb[0].mxu0
    %v1344 = vadd.f32 %v1231, %v1343
    %v1345 = vpop.f32.mrb[0].mxu0
    %v1346 = vadd.f32 %v1233, %v1345
    %v1347 = vpop.f32.mrb[0].mxu0
    %v1348 = vadd.f32 %v1235, %v1347
    %v1349 = vpop.f32.mrb[0].mxu0
    %v1350 = vadd.f32 %v1237, %v1349
    %1351 = vmatprep.mubr.bf16.mxu0 0
    %1352 = vmatmul.mubr.bf16.gmra.mrb[0].mxu0 %v908
    %v1353 = vpop.f32.mrb[0].mxu0
    %v1354 = vadd.f32 %v1241, %v1353
    %v1355 = vpop.f32.mrb[0].mxu0
    %v1356 = vadd.f32 %v1243, %v1355
    %v1357 = vpop.f32.mrb[0].mxu0
    %v1358 = vadd.f32 %v1245, %v1357
    %v1359 = vpop.f32.mrb[0].mxu0
    %v1360 = vadd.f32 %v1247, %v1359
    %1361 = vdwg.mxu0
    %v1362 = vmax.f32 %v1284, 0.0
    %v1363 = vmax.f32 %v1286, 0.0
    %v1364 = vmax.f32 %v1288, 0.0
    %v1365 = vmax.f32 %v1290, 0.0
    %v1366 = vmax.f32 %v1294, 0.0
    %v1367 = vmax.f32 %v1296, 0.0
    %v1368 = vmax.f32 %v1298, 0.0
    %v1369 = vmax.f32 %v1300, 0.0
    %v1370 = vmax.f32 %v1304, 0.0
    %v1371 = vmax.f32 %v1306, 0.0
    %v1372 = vmax.f32 %v1308, 0.0
    %v1373 = vmax.f32 %v1310, 0.0
    %v1374 = vmax.f32 %v1314, 0.0
    %v1375 = vmax.f32 %v1316, 0.0
    %v1376 = vmax.f32 %v1318, 0.0
    %v1377 = vmax.f32 %v1320, 0.0
    %v1378 = vmax.f32 %v1324, 0.0
    %v1379 = vmax.f32 %v1326, 0.0
    %v1380 = vmax.f32 %v1328, 0.0
    %v1381 = vmax.f32 %v1330, 0.0
    %v1382 = vmax.f32 %v1334, 0.0
    %v1383 = vmax.f32 %v1336, 0.0
    %v1384 = vmax.f32 %v1338, 0.0
    %v1385 = vmax.f32 %v1340, 0.0
    %v1386 = vmax.f32 %v1344, 0.0
    %v1387 = vmax.f32 %v1346, 0.0
    %v1388 = vmax.f32 %v1348, 0.0
    %v1389 = vmax.f32 %v1350, 0.0
    %v1390 = vmax.f32 %v1354, 0.0
    %v1391 = vmax.f32 %v1356, 0.0
    %v1392 = vmax.f32 %v1358, 0.0
    %v1393 = vmax.f32 %v1360, 0.0
    %v1394 = vpack.c.bf16 %v1364, %v1362
    %v1395 = vpack.c.bf16 %v1365, %v1363
    %v1396 = vpack.c.bf16 %v1368, %v1366
    %v1397 = vpack.c.bf16 %v1369, %v1367
    %v1398 = vpack.c.bf16 %v1372, %v1370
    %v1399 = vpack.c.bf16 %v1373, %v1371
    %v1400 = vpack.c.bf16 %v1376, %v1374
    %v1401 = vpack.c.bf16 %v1377, %v1375
    %v1402 = vpack.c.bf16 %v1380, %v1378
    %v1403 = vpack.c.bf16 %v1381, %v1379
    %v1404 = vpack.c.bf16 %v1384, %v1382
    %v1405 = vpack.c.bf16 %v1385, %v1383
    %v1406 = vpack.c.bf16 %v1388, %v1386
    %v1407 = vpack.c.bf16 %v1389, %v1387
    %v1408 = vpack.c.bf16 %v1392, %v1390
    %v1409 = vpack.c.bf16 %v1393, %v1391
    %v1410 = vld [vmem:[#allocation8] sm:$0xf]
    %v1411 = vld [vmem:[#allocation8 + $0x4] sm:$0xf]
    %v1412 = vld [vmem:[#allocation8 + $0x8] sm:$0xf]
    %v1413 = vld [vmem:[#allocation8 + $0xc] sm:$0xf]
    %v1414 = vld [vmem:[#allocation8 + $0x10] sm:$0xf]
    %v1415 = vld [vmem:[#allocation8 + $0x14] sm:$0xf]
    %v1416 = vld [vmem:[#allocation8 + $0x18] sm:$0xf]
    %v1417 = vld [vmem:[#allocation8 + $0x1c] sm:$0xf]
    %v1418 = vld [vmem:[#allocation8 + $0x20] sm:$0xf]
    %v1419 = vld [vmem:[#allocation8 + $0x24] sm:$0xf]
    %v1420 = vld [vmem:[#allocation8 + $0x28] sm:$0xf]
    %v1421 = vld [vmem:[#allocation8 + $0x2c] sm:$0xf]
    %v1422 = vld [vmem:[#allocation8 + $0x30] sm:$0xf]
    %v1423 = vld [vmem:[#allocation8 + $0x34] sm:$0xf]
    %v1424 = vld [vmem:[#allocation8 + $0x38] sm:$0xf]
    %v1425 = vld [vmem:[#allocation8 + $0x3c] sm:$0xf]
    %v1426 = vld [vmem:[#allocation8 + $0x40] sm:$0xf]
    %v1427 = vld [vmem:[#allocation8 + $0x44] sm:$0xf]
    %v1428 = vld [vmem:[#allocation8 + $0x48] sm:$0xf]
    %v1429 = vld [vmem:[#allocation8 + $0x4c] sm:$0xf]
    %v1430 = vld [vmem:[#allocation8 + $0x50] sm:$0xf]
    %v1431 = vld [vmem:[#allocation8 + $0x54] sm:$0xf]
    %v1432 = vld [vmem:[#allocation8 + $0x58] sm:$0xf]
    %v1433 = vld [vmem:[#allocation8 + $0x5c] sm:$0xf]
    %v1434 = vld [vmem:[#allocation8 + $0x60] sm:$0xf]
    %v1435 = vld [vmem:[#allocation8 + $0x64] sm:$0xf]
    %v1436 = vld [vmem:[#allocation8 + $0x68] sm:$0xf]
    %v1437 = vld [vmem:[#allocation8 + $0x6c] sm:$0xf]
    %v1438 = vld [vmem:[#allocation8 + $0x70] sm:$0xf]
    %v1439 = vld [vmem:[#allocation8 + $0x74] sm:$0xf]
    %v1440 = vld [vmem:[#allocation8 + $0x78] sm:$0xf]
    %v1441 = vld [vmem:[#allocation8 + $0x7c] sm:$0xf]
    %v1442 = vld [vmem:[#allocation10] sm:$0x1]
    %v1444 = vlaneseq
    %v1445 = vshrl.u32 %v1444, 7
    %v1446 = vsub.s32 0, %v1445
    %v1447 = vrot.slane %v1442, %v1446
    %v1481 = vunpack.c.l.b16 %v1410
    %v1482 = vunpack.c.l.b16 %v1411
    %v1483 = vunpack.c.l.b16 %v1412
    %v1484 = vunpack.c.l.b16 %v1413
    %v1485 = vunpack.c.l.b16 %v1414
    %v1486 = vunpack.c.l.b16 %v1415
    %v1487 = vunpack.c.l.b16 %v1416
    %v1488 = vunpack.c.l.b16 %v1417
    %v1489 = vunpack.c.l.b16 %v1418
    %v1490 = vunpack.c.l.b16 %v1419
    %v1491 = vunpack.c.l.b16 %v1420
    %v1492 = vunpack.c.l.b16 %v1421
    %v1493 = vunpack.c.l.b16 %v1422
    %v1494 = vunpack.c.l.b16 %v1423
    %v1495 = vunpack.c.l.b16 %v1424
    %v1496 = vunpack.c.l.b16 %v1425
    %v1497 = vunpack.c.l.b16 %v1426
    %v1498 = vunpack.c.l.b16 %v1427
    %v1499 = vunpack.c.l.b16 %v1428
    %v1500 = vunpack.c.l.b16 %v1429
    %v1501 = vunpack.c.l.b16 %v1430
    %v1502 = vunpack.c.l.b16 %v1431
    %v1503 = vunpack.c.l.b16 %v1432
    %v1504 = vunpack.c.l.b16 %v1433
    %v1505 = vunpack.c.l.b16 %v1434
    %v1506 = vunpack.c.l.b16 %v1435
    %v1507 = vunpack.c.l.b16 %v1436
    %v1508 = vunpack.c.l.b16 %v1437
    %v1509 = vunpack.c.l.b16 %v1438
    %v1510 = vunpack.c.l.b16 %v1439
    %v1511 = vunpack.c.l.b16 %v1440
    %v1512 = vunpack.c.l.b16 %v1441
    %v1513 = vpack.c.b16 %v1482, %v1481
    %v1514 = vpack.c.b16 %v1484, %v1483
    %v1515 = vpack.c.b16 %v1486, %v1485
    %v1516 = vpack.c.b16 %v1488, %v1487
    %v1517 = vpack.c.b16 %v1490, %v1489
    %v1518 = vpack.c.b16 %v1492, %v1491
    %v1519 = vpack.c.b16 %v1494, %v1493
    %v1520 = vpack.c.b16 %v1496, %v1495
    %v1521 = vpack.c.b16 %v1498, %v1497
    %v1522 = vpack.c.b16 %v1500, %v1499
    %v1523 = vpack.c.b16 %v1502, %v1501
    %v1524 = vpack.c.b16 %v1504, %v1503
    %v1525 = vpack.c.b16 %v1506, %v1505
    %v1526 = vpack.c.b16 %v1508, %v1507
    %v1527 = vpack.c.b16 %v1510, %v1509
    %v1528 = vpack.c.b16 %v1512, %v1511
    %1545 = vmatprep.subr.bf16.mxu0 0
    %1546 = vmatpush1.bf16.msra.mxu0 %v1513
    %1547 = vmatprep.subr.bf16.mxu0 0
    %1548 = vmatpush1.bf16.msra.mxu0 %v1514
    %1549 = vmatprep.subr.bf16.mxu0 0
    %1550 = vmatpush1.bf16.msra.mxu0 %v1515
    %1551 = vmatprep.subr.bf16.mxu0 0
    %1552 = vmatpush1.bf16.msra.mxu0 %v1516
    %1553 = vmatprep.subr.bf16.mxu0 0
    %1554 = vmatpush1.bf16.msra.mxu0 %v1517
    %1555 = vmatprep.subr.bf16.mxu0 0
    %1556 = vmatpush1.bf16.msra.mxu0 %v1518
    %1557 = vmatprep.subr.bf16.mxu0 0
    %1558 = vmatpush1.bf16.msra.mxu0 %v1519
    %1559 = vmatprep.subr.bf16.mxu0 0
    %1560 = vmatpush1.bf16.msra.mxu0 %v1520
    %1561 = vmatprep.subr.bf16.mxu0 0
    %1562 = vmatpush1.bf16.msra.mxu0 %v1521
    %1563 = vmatprep.subr.bf16.mxu0 0
    %1564 = vmatpush1.bf16.msra.mxu0 %v1522
    %1565 = vmatprep.subr.bf16.mxu0 0
    %1566 = vmatpush1.bf16.msra.mxu0 %v1523
    %1567 = vmatprep.subr.bf16.mxu0 0
    %1568 = vmatpush1.bf16.msra.mxu0 %v1524
    %1569 = vmatprep.subr.bf16.mxu0 0
    %1570 = vmatpush1.bf16.msra.mxu0 %v1525
    %1571 = vmatprep.subr.bf16.mxu0 0
    %1572 = vmatpush1.bf16.msra.mxu0 %v1526
    %1573 = vmatprep.subr.bf16.mxu0 0
    %1574 = vmatpush1.bf16.msra.mxu0 %v1527
    %1575 = vmatprep.subr.bf16.mxu0 0
    %1576 = vmatpush1.bf16.msra.mxu0 %v1528
    %1577 = vmatprep.mubr.bf16.mxu0 %v1395
    %1578 = vmatmul.mubr.bf16.gmra.mrb[0].mxu0 %v1394
    %v1579 = vpop.f32.mrb[0].mxu0
    %v1580 = vadd.f32 %v1447, %v1579
    %v1581 = vpop.f32.mrb[0].mxu0
    %v1582 = vpop.f32.mrb[0].mxu0
    %v1583 = vadd.f32 %v1447, %v1582
    %v1584 = vpop.f32.mrb[0].mxu0
    %1585 = vmatprep.mubr.bf16.mxu0 %v1397
    %1586 = vmatmul.mubr.bf16.gmra.mrb[0].mxu0 %v1396
    %v1587 = vpop.f32.mrb[0].mxu0
    %v1588 = vadd.f32 %v1447, %v1587
    %v1589 = vpop.f32.mrb[0].mxu0
    %v1590 = vpop.f32.mrb[0].mxu0
    %v1591 = vadd.f32 %v1447, %v1590
    %v1592 = vpop.f32.mrb[0].mxu0
    %1593 = vmatprep.mubr.bf16.mxu0 %v1399
    %1594 = vmatmul.mubr.bf16.gmra.mrb[0].mxu0 %v1398
    %v1595 = vpop.f32.mrb[0].mxu0
    %v1596 = vadd.f32 %v1447, %v1595
    %v1597 = vpop.f32.mrb[0].mxu0
    %v1598 = vpop.f32.mrb[0].mxu0
    %v1599 = vadd.f32 %v1447, %v1598
    %v1600 = vpop.f32.mrb[0].mxu0
    %1601 = vmatprep.mubr.bf16.mxu0 %v1401
    %1602 = vmatmul.mubr.bf16.gmra.mrb[0].mxu0 %v1400
    %v1603 = vpop.f32.mrb[0].mxu0
    %v1604 = vadd.f32 %v1447, %v1603
    %v1605 = vpop.f32.mrb[0].mxu0
    %v1606 = vpop.f32.mrb[0].mxu0
    %v1607 = vadd.f32 %v1447, %v1606
    %v1608 = vpop.f32.mrb[0].mxu0
    %1609 = vmatprep.mubr.bf16.mxu0 %v1403
    %1610 = vmatmul.mubr.bf16.gmra.mrb[0].mxu0 %v1402
    %v1611 = vpop.f32.mrb[0].mxu0
    %v1612 = vadd.f32 %v1447, %v1611
    %v1613 = vpop.f32.mrb[0].mxu0
    %v1614 = vpop.f32.mrb[0].mxu0
    %v1615 = vadd.f32 %v1447, %v1614
    %v1616 = vpop.f32.mrb[0].mxu0
    %1617 = vmatprep.mubr.bf16.mxu0 %v1405
    %1618 = vmatmul.mubr.bf16.gmra.mrb[0].mxu0 %v1404
    %v1619 = vpop.f32.mrb[0].mxu0
    %v1620 = vadd.f32 %v1447, %v1619
    %v1621 = vpop.f32.mrb[0].mxu0
    %v1622 = vpop.f32.mrb[0].mxu0
    %v1623 = vadd.f32 %v1447, %v1622
    %v1624 = vpop.f32.mrb[0].mxu0
    %1625 = vmatprep.mubr.bf16.mxu0 %v1407
    %1626 = vmatmul.mubr.bf16.gmra.mrb[0].mxu0 %v1406
    %v1627 = vpop.f32.mrb[0].mxu0
    %v1628 = vadd.f32 %v1447, %v1627
    %v1629 = vpop.f32.mrb[0].mxu0
    %v1630 = vpop.f32.mrb[0].mxu0
    %v1631 = vadd.f32 %v1447, %v1630
    %v1632 = vpop.f32.mrb[0].mxu0
    %1633 = vmatprep.mubr.bf16.mxu0 %v1409
    %1634 = vmatmul.mubr.bf16.gmra.mrb[0].mxu0 %v1408
    %v1635 = vpop.f32.mrb[0].mxu0
    %v1636 = vadd.f32 %v1447, %v1635
    %v1637 = vpop.f32.mrb[0].mxu0
    %v1638 = vpop.f32.mrb[0].mxu0
    %v1639 = vadd.f32 %v1447, %v1638
    %v1640 = vpop.f32.mrb[0].mxu0
    %1641 = vdwg.mxu0
    %v1642 = vmax.f32 %v1580, 0.0
    %v1643 = vmax.f32 %v1583, 0.0
    %v1644 = vmax.f32 %v1588, 0.0
    %v1645 = vmax.f32 %v1591, 0.0
    %v1646 = vmax.f32 %v1596, 0.0
    %v1647 = vmax.f32 %v1599, 0.0
    %v1648 = vmax.f32 %v1604, 0.0
    %v1649 = vmax.f32 %v1607, 0.0
    %v1650 = vmax.f32 %v1612, 0.0
    %v1651 = vmax.f32 %v1615, 0.0
    %v1652 = vmax.f32 %v1620, 0.0
    %v1653 = vmax.f32 %v1623, 0.0
    %v1654 = vmax.f32 %v1628, 0.0
    %v1655 = vmax.f32 %v1631, 0.0
    %v1656 = vmax.f32 %v1636, 0.0
    %v1657 = vmax.f32 %v1639, 0.0
    %v1658 = vpack.c.bf16 %v1643, %v1642
    %v1659 = vpack.c.bf16 %v1645, %v1644
    %v1660 = vpack.c.bf16 %v1647, %v1646
    %v1661 = vpack.c.bf16 %v1649, %v1648
    %v1662 = vpack.c.bf16 %v1651, %v1650
    %v1663 = vpack.c.bf16 %v1653, %v1652
    %v1664 = vpack.c.bf16 %v1655, %v1654
    %v1665 = vpack.c.bf16 %v1657, %v1656
    %v1666 = vld [vmem:[#allocation11] sm:$0xf]
    %v1667 = vld [vmem:[#allocation11 + $0x4] sm:$0xf]
    %v1668 = vld [vmem:[#allocation11 + $0x8] sm:$0xf]
    %v1669 = vld [vmem:[#allocation11 + $0xc] sm:$0xf]
    %v1670 = vld [vmem:[#allocation11 + $0x10] sm:$0xf]
    %v1671 = vld [vmem:[#allocation11 + $0x14] sm:$0xf]
    %v1672 = vld [vmem:[#allocation11 + $0x18] sm:$0xf]
    %v1673 = vld [vmem:[#allocation11 + $0x1c] sm:$0xf]
    %v1674 = vld [vmem:[#allocation13] sm:$0x1]
    %v1676 = vlaneseq
    %v1677 = vshrl.u32 %v1676, 7
    %v1678 = vsub.s32 0, %v1677
    %v1679 = vrot.slane %v1674, %v1678
    %v1689 = vunpack.c.l.b16 %v1666
    %v1690 = vunpack.c.l.b16 %v1667
    %v1691 = vunpack.c.l.b16 %v1668
    %v1692 = vunpack.c.l.b16 %v1669
    %v1693 = vunpack.c.l.b16 %v1670
    %v1694 = vunpack.c.l.b16 %v1671
    %v1695 = vunpack.c.l.b16 %v1672
    %v1696 = vunpack.c.l.b16 %v1673
    %v1697 = vpack.c.b16 %v1690, %v1689
    %v1698 = vpack.c.b16 %v1692, %v1691
    %v1699 = vpack.c.b16 %v1694, %v1693
    %v1700 = vpack.c.b16 %v1696, %v1695
    %vm1705 = vcmask 523264
    %v1707 = vsel %vm1705, %v1658, 0
    %v1710 = vsel %vm1705, %v1659, 0
    %v1713 = vsel %vm1705, %v1660, 0
    %v1716 = vsel %vm1705, %v1661, 0
    %v1719 = vsel %vm1705, %v1662, 0
    %v1722 = vsel %vm1705, %v1663, 0
    %v1725 = vsel %vm1705, %v1664, 0
    %v1728 = vsel %vm1705, %v1665, 0
    %1730 = vmatprep.subr.bf16.mxu0 0
    %1731 = vmatpush1.bf16.msra.mxu0 %v1697
    %1732 = vmatprep.subr.bf16.mxu0 0
    %1733 = vmatpush1.bf16.msra.mxu0 %v1698
    %1734 = vmatprep.subr.bf16.mxu0 0
    %1735 = vmatpush1.bf16.msra.mxu0 %v1699
    %1736 = vmatprep.subr.bf16.mxu0 0
    %1737 = vmatpush1.bf16.msra.mxu0 %v1700
    %1738 = vmatprep.subr.bf16.mxu0 0
    %1739 = vmatpush1.bf16.msra.mxu0 0
    %1740 = vmatprep.subr.bf16.mxu0 0
    %1741 = vmatpush1.bf16.msra.mxu0 0
    %1742 = vmatprep.subr.bf16.mxu0 0
    %1743 = vmatpush1.bf16.msra.mxu0 0
    %1744 = vmatprep.subr.bf16.mxu0 0
    %1745 = vmatpush1.bf16.msra.mxu0 0
    %1746 = vmatprep.subr.bf16.mxu0 0
    %1747 = vmatpush1.bf16.msra.mxu0 0
    %1748 = vmatprep.subr.bf16.mxu0 0
    %1749 = vmatpush1.bf16.msra.mxu0 0
    %1750 = vmatprep.subr.bf16.mxu0 0
    %1751 = vmatpush1.bf16.msra.mxu0 0
    %1752 = vmatprep.subr.bf16.mxu0 0
    %1753 = vmatpush1.bf16.msra.mxu0 0
    %1754 = vmatprep.subr.bf16.mxu0 0
    %1755 = vmatpush1.bf16.msra.mxu0 0
    %1756 = vmatprep.subr.bf16.mxu0 0
    %1757 = vmatpush1.bf16.msra.mxu0 0
    %1758 = vmatprep.subr.bf16.mxu0 0
    %1759 = vmatpush1.bf16.msra.mxu0 0
    %1760 = vmatprep.subr.bf16.mxu0 0
    %1761 = vmatpush1.bf16.msra.mxu0 0
    %1762 = vmatprep.mubr.bf16.mxu0 0
    %1763 = vmatmul.mubr.bf16.gmra.mrb[0].mxu0 %v1707
    %v1764 = vpop.f32.mrb[0].mxu0
    %v1765 = vadd.f32 %v1679, %v1764
    %v1766 = vpop.f32.mrb[0].mxu0
    %v1767 = vpop.f32.mrb[0].mxu0
    %v1768 = vadd.f32 %v1679, %v1767
    %v1769 = vpop.f32.mrb[0].mxu0
    %1770 = vmatprep.mubr.bf16.mxu0 0
    %1771 = vmatmul.mubr.bf16.gmra.mrb[0].mxu0 %v1710
    %v1772 = vpop.f32.mrb[0].mxu0
    %v1773 = vadd.f32 %v1679, %v1772
    %v1774 = vpop.f32.mrb[0].mxu0
    %v1775 = vpop.f32.mrb[0].mxu0
    %v1776 = vadd.f32 %v1679, %v1775
    %v1777 = vpop.f32.mrb[0].mxu0
    %1778 = vmatprep.mubr.bf16.mxu0 0
    %1779 = vmatmul.mubr.bf16.gmra.mrb[0].mxu0 %v1713
    %v1780 = vpop.f32.mrb[0].mxu0
    %v1781 = vadd.f32 %v1679, %v1780
    %v1782 = vpop.f32.mrb[0].mxu0
    %v1783 = vpop.f32.mrb[0].mxu0
    %v1784 = vadd.f32 %v1679, %v1783
    %v1785 = vpop.f32.mrb[0].mxu0
    %1786 = vmatprep.mubr.bf16.mxu0 0
    %1787 = vmatmul.mubr.bf16.gmra.mrb[0].mxu0 %v1716
    %v1788 = vpop.f32.mrb[0].mxu0
    %v1789 = vadd.f32 %v1679, %v1788
    %v1790 = vpop.f32.mrb[0].mxu0
    %v1791 = vpop.f32.mrb[0].mxu0
    %v1792 = vadd.f32 %v1679, %v1791
    %v1793 = vpop.f32.mrb[0].mxu0
    %1794 = vmatprep.mubr.bf16.mxu0 0
    %1795 = vmatmul.mubr.bf16.gmra.mrb[0].mxu0 %v1719
    %v1796 = vpop.f32.mrb[0].mxu0
    %v1797 = vadd.f32 %v1679, %v1796
    %v1798 = vpop.f32.mrb[0].mxu0
    %v1799 = vpop.f32.mrb[0].mxu0
    %v1800 = vadd.f32 %v1679, %v1799
    %v1801 = vpop.f32.mrb[0].mxu0
    %1802 = vmatprep.mubr.bf16.mxu0 0
    %1803 = vmatmul.mubr.bf16.gmra.mrb[0].mxu0 %v1722
    %v1804 = vpop.f32.mrb[0].mxu0
    %v1805 = vadd.f32 %v1679, %v1804
    %v1806 = vpop.f32.mrb[0].mxu0
    %v1807 = vpop.f32.mrb[0].mxu0
    %v1808 = vadd.f32 %v1679, %v1807
    %v1809 = vpop.f32.mrb[0].mxu0
    %1810 = vmatprep.mubr.bf16.mxu0 0
    %1811 = vmatmul.mubr.bf16.gmra.mrb[0].mxu0 %v1725
    %v1812 = vpop.f32.mrb[0].mxu0
    %v1813 = vadd.f32 %v1679, %v1812
    %v1814 = vpop.f32.mrb[0].mxu0
    %v1815 = vpop.f32.mrb[0].mxu0
    %v1816 = vadd.f32 %v1679, %v1815
    %v1817 = vpop.f32.mrb[0].mxu0
    %1818 = vmatprep.mubr.bf16.mxu0 0
    %1819 = vmatmul.mubr.bf16.gmra.mrb[0].mxu0 %v1728
    %v1820 = vpop.f32.mrb[0].mxu0
    %v1821 = vadd.f32 %v1679, %v1820
    %v1822 = vpop.f32.mrb[0].mxu0
    %v1823 = vpop.f32.mrb[0].mxu0
    %v1824 = vadd.f32 %v1679, %v1823
    %v1825 = vpop.f32.mrb[0].mxu0
    %1826 = vdwg.mxu0
    %vm1827 = vcmask 80896
    %v1828 = vsel %vm1827, %v1765, -inf
    %1829 = vmax.xlane.f32.xlu0 %v1828
    %v1830 = vpop.xlane.xlu0 %1829
    %v1831 = vsel %vm1827, %v1768, -inf
    %1832 = vmax.xlane.f32.xlu0 %v1831
    %v1833 = vpop.xlane.xlu0 %1832
    %v1834 = vsel %vm1827, %v1773, -inf
    %1835 = vmax.xlane.f32.xlu0 %v1834
    %v1836 = vpop.xlane.xlu0 %1835
    %v1837 = vsel %vm1827, %v1776, -inf
    %1838 = vmax.xlane.f32.xlu0 %v1837
    %v1839 = vpop.xlane.xlu0 %1838
    %v1840 = vsel %vm1827, %v1781, -inf
    %1841 = vmax.xlane.f32.xlu0 %v1840
    %v1842 = vpop.xlane.xlu0 %1841
    %v1843 = vsel %vm1827, %v1784, -inf
    %1844 = vmax.xlane.f32.xlu0 %v1843
    %v1845 = vpop.xlane.xlu0 %1844
    %v1846 = vsel %vm1827, %v1789, -inf
    %1847 = vmax.xlane.f32.xlu0 %v1846
    %v1848 = vpop.xlane.xlu0 %1847
    %v1849 = vsel %vm1827, %v1792, -inf
    %1850 = vmax.xlane.f32.xlu0 %v1849
    %v1851 = vpop.xlane.xlu0 %1850
    %v1852 = vsel %vm1827, %v1797, -inf
    %1853 = vmax.xlane.f32.xlu0 %v1852
    %v1854 = vpop.xlane.xlu0 %1853
    %v1855 = vsel %vm1827, %v1800, -inf
    %1856 = vmax.xlane.f32.xlu0 %v1855
    %v1857 = vpop.xlane.xlu0 %1856
    %v1858 = vsel %vm1827, %v1805, -inf
    %1859 = vmax.xlane.f32.xlu0 %v1858
    %v1860 = vpop.xlane.xlu0 %1859
    %v1861 = vsel %vm1827, %v1808, -inf
    %1862 = vmax.xlane.f32.xlu0 %v1861
    %v1863 = vpop.xlane.xlu0 %1862
    %v1864 = vsel %vm1827, %v1813, -inf
    %1865 = vmax.xlane.f32.xlu0 %v1864
    %v1866 = vpop.xlane.xlu0 %1865
    %v1867 = vsel %vm1827, %v1816, -inf
    %1868 = vmax.xlane.f32.xlu0 %v1867
    %v1869 = vpop.xlane.xlu0 %1868
    %v1870 = vsel %vm1827, %v1821, -inf
    %1871 = vmax.xlane.f32.xlu0 %v1870
    %v1872 = vpop.xlane.xlu0 %1871
    %v1873 = vsel %vm1827, %v1824, -inf
    %1874 = vmax.xlane.f32.xlu0 %v1873
    %v1875 = vpop.xlane.xlu0 %1874
    %v1876 = vsub.f32 %v1765, %v1830
    %v1877 = vsub.f32 %v1768, %v1833
    %v1878 = vsub.f32 %v1773, %v1836
    %v1879 = vsub.f32 %v1776, %v1839
    %v1880 = vsub.f32 %v1781, %v1842
    %v1881 = vsub.f32 %v1784, %v1845
    %v1882 = vsub.f32 %v1789, %v1848
    %v1883 = vsub.f32 %v1792, %v1851
    %v1884 = vsub.f32 %v1797, %v1854
    %v1885 = vsub.f32 %v1800, %v1857
    %v1886 = vsub.f32 %v1805, %v1860
    %v1887 = vsub.f32 %v1808, %v1863
    %v1888 = vsub.f32 %v1813, %v1866
    %v1889 = vsub.f32 %v1816, %v1869
    %v1890 = vsub.f32 %v1821, %v1872
    %v1891 = vsub.f32 %v1824, %v1875
    %v1892 = vmul.f32 %v1876, 1.442695
    %v1893 = vpow.pop %v1892
    %v1894 = vmul.f32 %v1877, 1.442695
    %v1895 = vpow.pop %v1894
    %v1896 = vmul.f32 %v1878, 1.442695
    %v1897 = vpow.pop %v1896
    %v1898 = vmul.f32 %v1879, 1.442695
    %v1899 = vpow.pop %v1898
    %v1900 = vmul.f32 %v1880, 1.442695
    %v1901 = vpow.pop %v1900
    %v1902 = vmul.f32 %v1881, 1.442695
    %v1903 = vpow.pop %v1902
    %v1904 = vmul.f32 %v1882, 1.442695
    %v1905 = vpow.pop %v1904
    %v1906 = vmul.f32 %v1883, 1.442695
    %v1907 = vpow.pop %v1906
    %v1908 = vmul.f32 %v1884, 1.442695
    %v1909 = vpow.pop %v1908
    %v1910 = vmul.f32 %v1885, 1.442695
    %v1911 = vpow.pop %v1910
    %v1912 = vmul.f32 %v1886, 1.442695
    %v1913 = vpow.pop %v1912
    %v1914 = vmul.f32 %v1887, 1.442695
    %v1915 = vpow.pop %v1914
    %v1916 = vmul.f32 %v1888, 1.442695
    %v1917 = vpow.pop %v1916
    %v1918 = vmul.f32 %v1889, 1.442695
    %v1919 = vpow.pop %v1918
    %v1920 = vmul.f32 %v1890, 1.442695
    %v1921 = vpow.pop %v1920
    %v1922 = vmul.f32 %v1891, 1.442695
    %v1923 = vpow.pop %v1922
    %v1924 = vsel %vm1827, %v1893, 0.0
    %1925 = vadd.xlane.f32.xlu0 %v1924
    %v1926 = vpop.xlane.xlu0 %1925
    %v1927 = vsel %vm1827, %v1895, 0.0
    %1928 = vadd.xlane.f32.xlu0 %v1927
    %v1929 = vpop.xlane.xlu0 %1928
    %v1930 = vsel %vm1827, %v1897, 0.0
    %1931 = vadd.xlane.f32.xlu0 %v1930
    %v1932 = vpop.xlane.xlu0 %1931
    %v1933 = vsel %vm1827, %v1899, 0.0
    %1934 = vadd.xlane.f32.xlu0 %v1933
    %v1935 = vpop.xlane.xlu0 %1934
    %v1936 = vsel %vm1827, %v1901, 0.0
    %1937 = vadd.xlane.f32.xlu0 %v1936
    %v1938 = vpop.xlane.xlu0 %1937
    %v1939 = vsel %vm1827, %v1903, 0.0
    %1940 = vadd.xlane.f32.xlu0 %v1939
    %v1941 = vpop.xlane.xlu0 %1940
    %v1942 = vsel %vm1827, %v1905, 0.0
    %1943 = vadd.xlane.f32.xlu0 %v1942
    %v1944 = vpop.xlane.xlu0 %1943
    %v1945 = vsel %vm1827, %v1907, 0.0
    %1946 = vadd.xlane.f32.xlu0 %v1945
    %v1947 = vpop.xlane.xlu0 %1946
    %v1948 = vsel %vm1827, %v1909, 0.0
    %1949 = vadd.xlane.f32.xlu0 %v1948
    %v1950 = vpop.xlane.xlu0 %1949
    %v1951 = vsel %vm1827, %v1911, 0.0
    %1952 = vadd.xlane.f32.xlu0 %v1951
    %v1953 = vpop.xlane.xlu0 %1952
    %v1954 = vsel %vm1827, %v1913, 0.0
    %1955 = vadd.xlane.f32.xlu0 %v1954
    %v1956 = vpop.xlane.xlu0 %1955
    %v1957 = vsel %vm1827, %v1915, 0.0
    %1958 = vadd.xlane.f32.xlu0 %v1957
    %v1959 = vpop.xlane.xlu0 %1958
    %v1960 = vsel %vm1827, %v1917, 0.0
    %1961 = vadd.xlane.f32.xlu0 %v1960
    %v1962 = vpop.xlane.xlu0 %1961
    %v1963 = vsel %vm1827, %v1919, 0.0
    %1964 = vadd.xlane.f32.xlu0 %v1963
    %v1965 = vpop.xlane.xlu0 %1964
    %v1966 = vsel %vm1827, %v1921, 0.0
    %1967 = vadd.xlane.f32.xlu0 %v1966
    %v1968 = vpop.xlane.xlu0 %1967
    %v1969 = vsel %vm1827, %v1923, 0.0
    %1970 = vadd.xlane.f32.xlu0 %v1969
    %v1971 = vpop.xlane.xlu0 %1970
    %v1972 = vlog2.pop %v1926
    %v1973 = vmul.f32 %v1972, 0.6931472
    %v1974 = vlog2.pop %v1929
    %v1975 = vmul.f32 %v1974, 0.6931472
    %v1976 = vlog2.pop %v1932
    %v1977 = vmul.f32 %v1976, 0.6931472
    %v1978 = vlog2.pop %v1935
    %v1979 = vmul.f32 %v1978, 0.6931472
    %v1980 = vlog2.pop %v1938
    %v1981 = vmul.f32 %v1980, 0.6931472
    %v1982 = vlog2.pop %v1941
    %v1983 = vmul.f32 %v1982, 0.6931472
    %v1984 = vlog2.pop %v1944
    %v1985 = vmul.f32 %v1984, 0.6931472
    %v1986 = vlog2.pop %v1947
    %v1987 = vmul.f32 %v1986, 0.6931472
    %v1988 = vlog2.pop %v1950
    %v1989 = vmul.f32 %v1988, 0.6931472
    %v1990 = vlog2.pop %v1953
    %v1991 = vmul.f32 %v1990, 0.6931472
    %v1992 = vlog2.pop %v1956
    %v1993 = vmul.f32 %v1992, 0.6931472
    %v1994 = vlog2.pop %v1959
    %v1995 = vmul.f32 %v1994, 0.6931472
    %v1996 = vlog2.pop %v1962
    %v1997 = vmul.f32 %v1996, 0.6931472
    %v1998 = vlog2.pop %v1965
    %v1999 = vmul.f32 %v1998, 0.6931472
    %v2000 = vlog2.pop %v1968
    %v2001 = vmul.f32 %v2000, 0.6931472
    %v2002 = vlog2.pop %v1971
    %v2003 = vmul.f32 %v2002, 0.6931472
    %v2004 = vsub.f32 %v1876, %v1973
    %v2005 = vsub.f32 %v1877, %v1975
    %v2006 = vsub.f32 %v1878, %v1977
    %v2007 = vsub.f32 %v1879, %v1979
    %v2008 = vsub.f32 %v1880, %v1981
    %v2009 = vsub.f32 %v1881, %v1983
    %v2010 = vsub.f32 %v1882, %v1985
    %v2011 = vsub.f32 %v1883, %v1987
    %v2012 = vsub.f32 %v1884, %v1989
    %v2013 = vsub.f32 %v1885, %v1991
    %v2014 = vsub.f32 %v1886, %v1993
    %v2015 = vsub.f32 %v1887, %v1995
    %v2016 = vsub.f32 %v1888, %v1997
    %v2017 = vsub.f32 %v1889, %v1999
    %v2018 = vsub.f32 %v1890, %v2001
    %v2019 = vsub.f32 %v1891, %v2003
    %2020 = vst.msk [vmem:[#allocation14] sm:$0xff] %vm1827, %v2004
    %2021 = vst.msk [vmem:[#allocation14 + $0x8] sm:$0xff] %vm1827, %v2005
    %2022 = vst.msk [vmem:[#allocation14 + $0x10] sm:$0xff] %vm1827, %v2006
    %2023 = vst.msk [vmem:[#allocation14 + $0x18] sm:$0xff] %vm1827, %v2007
    %2024 = vst.msk [vmem:[#allocation14 + $0x20] sm:$0xff] %vm1827, %v2008
    %2025 = vst.msk [vmem:[#allocation14 + $0x28] sm:$0xff] %vm1827, %v2009
    %2026 = vst.msk [vmem:[#allocation14 + $0x30] sm:$0xff] %vm1827, %v2010
    %2027 = vst.msk [vmem:[#allocation14 + $0x38] sm:$0xff] %vm1827, %v2011
    %2028 = vst.msk [vmem:[#allocation14 + $0x40] sm:$0xff] %vm1827, %v2012
    %2029 = vst.msk [vmem:[#allocation14 + $0x48] sm:$0xff] %vm1827, %v2013
    %2030 = vst.msk [vmem:[#allocation14 + $0x50] sm:$0xff] %vm1827, %v2014
    %2031 = vst.msk [vmem:[#allocation14 + $0x58] sm:$0xff] %vm1827, %v2015
    %2032 = vst.msk [vmem:[#allocation14 + $0x60] sm:$0xff] %vm1827, %v2016
    %2033 = vst.msk [vmem:[#allocation14 + $0x68] sm:$0xff] %vm1827, %v2017
    %2034 = vst.msk [vmem:[#allocation14 + $0x70] sm:$0xff] %vm1827, %v2018
    %2035 = vst.msk [vmem:[#allocation14 + $0x78] sm:$0xff] %vm1827, %v2019
    // Predicated region
    $region58: #{net_forward.1} parent=1 // pred_check
      _
    $region59: #{net_forward.1} parent=1 // pred_check_branch
      %2037 = sbr.rel (0) target = $region61
    $region60: #{net_forward.1} parent=1 // pred_region
      %s2039 = ssub.s32 2048, 256
      %2040 = vsyncadd [#allocation4], %s2039
      %s2041 = sshll.u32 [#allocation14], 4
      %s2042 = int_to_ptr.vmem [resolvable:$true] %s2041
      %2047 = dma.vmem_to_hbm [thread:$0]  %s2042, 256, %s7, [#allocation4], 128, 128, 8
    $region61: #{net_forward.1} parent=1 // pred_fallthru
      _
    // Predicated region
    $region62: #{net_forward.1} parent=1 // pred_check
      _
    $region63: #{net_forward.1} parent=1 // pred_check_branch
      %2049 = sbr.rel (0) target = $region65
    $region64: #{net_forward.1} parent=1 // pred_region
      %2050 = dma.done [#allocation4], 2048
    $region65: #{net_forward.1} parent=1 // pred_fallthru
      _
    %2051 = vsyncpa [#allocation3], 1
    %2052 = vsyncpa [#allocation6], 1
    %2053 = vsyncpa [#allocation9], 1
    %2054 = vsyncpa [#allocation12], 1
    %2055 = vsyncpa [#allocation4], 1

</llo_original>
